<compile_context>
chip_gen: v5e
topology: v5e:2x2
jax: 0.10.0
libtpu: 0.0.40
codegen_flags: <defaults>
</compile_context>

<pallas_src>
import jax
import jax.numpy as jnp
import numpy as np
from jax import lax
from jax.experimental import pallas as pl
from jax.experimental.pallas import tpu as pltpu


# ---------------------------------------------------------------------------
# Phase 1: fused 1x1-conv projections (theta | phi | g) + 2x2 max-pool of phi/g
# ---------------------------------------------------------------------------
def _proj_pool_kernel(xw_ref, wtpg_ref, theta_ref, phi_ref, g_ref):
    # xw_ref   : (1, HW4, C)      bf16  pixels of pool-window offset j
    # wtpg_ref : (C, 2*C8 + C2)   bf16  [w_theta | w_phi | w_g]^T (fused)
    # theta_ref: (1, HW4, C8)     bf16  theta for this offset's pixels
    # phi_ref  : (1, HW4, C8)     bf16  pooled phi (max-accumulated over j)
    # g_ref    : (1, HW4, C2)     bf16  pooled g   (max-accumulated over j)
    j = pl.program_id(1)
    c8 = theta_ref.shape[-1]

    proj = jnp.dot(xw_ref[0], wtpg_ref[...],
                   preferred_element_type=jnp.float32)        # (HW4, 2*C8+C2)
    theta_ref[0] = proj[:, :c8].astype(theta_ref.dtype)
    phi_j = proj[:, c8:2 * c8].astype(phi_ref.dtype)
    g_j = proj[:, 2 * c8:].astype(g_ref.dtype)

    # 2x2 max-pool == elementwise max over the 4 pool-window offsets.  The
    # pooled outputs' block index is constant in j, so these blocks stay
    # VMEM-resident across the (arbitrary) j axis and act as max-accumulators.
    @pl.when(j == 0)
    def _():
        phi_ref[0] = phi_j
        g_ref[0] = g_j

    @pl.when(j > 0)
    def _():
        phi_ref[0] = jnp.maximum(phi_ref[0], phi_j)
        g_ref[0] = jnp.maximum(g_ref[0], g_j)


# ---------------------------------------------------------------------------
# Phase 2: per-query-tile attention (scores, softmax, values, o-conv, residual)
# ---------------------------------------------------------------------------
def _make_attention_kernel(use_bf16_exp):
    def kernel(theta_ref, phi_ref, g_ref, xres_ref, wog_ref, out_ref):
        # theta_ref: (1, HW4, C8) bf16  queries of this tile
        # phi_ref  : (1, HW4, C8) bf16  pooled keys   (whole image)
        # g_ref    : (1, HW4, C2) bf16  pooled values (whole image)
        # xres_ref : (1, HW4, C)  bf16  residual x for this tile
        # wog_ref  : (C2, C)      bf16  (gamma * w_o)^T
        # out_ref  : (1, HW4, C)  f32
        # Scores: contract the C8 axes directly (no phi transpose / scratch).
        s = lax.dot_general(theta_ref[0], phi_ref[0],
                            (((1,), (1,)), ((), ())),
                            preferred_element_type=jnp.float32)   # (HW4, HW4)
        m = jnp.max(s, axis=-1, keepdims=True)
        z = s - m
        if use_bf16_exp:   # bf16 EUP (v6e / v7x): faster exp, half the vregs
            p = jnp.exp(z.astype(jnp.bfloat16))
            r = jnp.sum(p.astype(jnp.float32), axis=-1, keepdims=True)
        else:              # v5e and older: no bf16 EUP/VPU -> stay in f32
            pf = jnp.exp(z)
            r = jnp.sum(pf, axis=-1, keepdims=True)
            p = pf.astype(jnp.bfloat16)
        attn = jnp.dot(p, g_ref[0],
                       preferred_element_type=jnp.float32)        # (HW4, C2)
        # Deferred softmax normalization (approximate reciprocal -> EUP slot).
        attn = attn * pl.reciprocal(r, approx=True)
        o = jnp.dot(attn.astype(jnp.bfloat16), wog_ref[...],
                    preferred_element_type=jnp.float32)           # (HW4, C)
        out_ref[0] = (o + xres_ref[0].astype(jnp.float32)).astype(out_ref.dtype)

    return kernel


# ---------------------------------------------------------------------------
# Host-side helpers
# ---------------------------------------------------------------------------
def _use_bf16_exp():
    try:
        kind = jax.devices()[0].device_kind.lower()
    except Exception:
        return False
    # bf16 EUP/VPU exists from v6e onward; keep f32 exp on v2..v5 (incl. v5e).
    return not any(v in kind for v in ("v2", "v3", "v4", "v5"))


def _vmem_limit(est_bytes):
    cap = 128 * 2**20
    try:
        cap = int(pltpu.get_tpu_info().vmem_capacity_bytes)
    except Exception:
        pass
    # ~15% headroom below physical VMEM for compiler scratch / semaphores.
    return int(min(max(32 * 2**20, 2 * est_bytes), int(cap * 0.85)))


@jax.jit
def attention_forward(x, w_theta, w_phi, w_g, w_o, gamma):
    """x: (B, C, H, W) float32, NCHW (same as the PyTorch module)."""
    B, C, H, W = x.shape
    assert H % 2 == 0 and W % 2 == 0, "2x2 max-pool requires even H, W"
    assert C % 8 == 0, "channels must be divisible by 8 (channels // 8 conv)"
    H2, W2 = H // 2, W // 2
    HW, HW4 = H * W, H2 * W2
    C8, C2 = C // 8, C // 2
    Ctot = 2 * C8 + C2
    assert HW4 % 8 == 0, "pool-window tile must be sublane aligned"

    bf16 = jnp.bfloat16
    # Single HBM copy of x: bf16, pool-window-major pixel order (kh, kw, h2, w2).
    # Row block j of the HW axis holds the pixels at offset (j//2, j%2) of
    # every 2x2 pooling window.
    # TODO(synk): in a full model this permute (and the inverse one below)
    # should be fused into the neighbouring layers instead of standalone
    # HBM passes.
    xw = x.reshape(B, C, H2, 2, W2, 2).transpose(0, 3, 5, 2, 4, 1)
    xw = xw.reshape(B, HW, C).astype(bf16)

    # Fused projection weight [w_theta | w_phi | w_g]^T -> lane-dense N = 3C/4.
    wtpg = jnp.concatenate(
        [jnp.asarray(w_theta, jnp.float32),
         jnp.asarray(w_phi, jnp.float32),
         jnp.asarray(w_g, jnp.float32)], axis=0).T.astype(bf16)      # (C, Ctot)
    # gamma folded into the output projection -> kernel epilogue is just "+x".
    wog = (jnp.asarray(gamma, jnp.float32)
           * jnp.asarray(w_o, jnp.float32)).T.astype(bf16)           # (C2, C)

    # -------------------- phase 1: projections + max-pool --------------------
    est1 = (2 * HW4 * C * 2            # x tile (bf16, double buffered)
            + 2 * C * Ctot * 2         # fused weight
            + 2 * HW4 * C8 * 2         # theta out block
            + 2 * HW4 * (C8 + C2) * 2  # pooled phi / g out blocks
            + 2 * HW4 * Ctot * 4)      # f32 projection temporaries
    theta, phi_p, g_p = pl.pallas_call(
        _proj_pool_kernel,
        out_shape=(jax.ShapeDtypeStruct((B, HW, C8), bf16),
                   jax.ShapeDtypeStruct((B, HW4, C8), bf16),
                   jax.ShapeDtypeStruct((B, HW4, C2), bf16)),
        grid=(B, 4),
        in_specs=[pl.BlockSpec((1, HW4, C), lambda b, j: (b, j, 0)),
                  pl.BlockSpec((C, Ctot), lambda b, j: (0, 0))],
        out_specs=(pl.BlockSpec((1, HW4, C8), lambda b, j: (b, j, 0)),
                   pl.BlockSpec((1, HW4, C8), lambda b, j: (b, 0, 0)),
                   pl.BlockSpec((1, HW4, C2), lambda b, j: (b, 0, 0))),
        compiler_params=pltpu.CompilerParams(
            dimension_semantics=("parallel", "arbitrary"),
            vmem_limit_bytes=_vmem_limit(est1)),
        cost_estimate=pl.CostEstimate(
            flops=2 * B * HW * C * Ctot,
            transcendentals=0,
            bytes_accessed=B * (HW * C * 2 + HW * C8 * 2
                                + HW4 * (C8 + C2) * 2) + C * Ctot * 2),
    )(xw, wtpg)

    # -------------------- phase 2: attention per query tile ------------------
    est2 = (4 * HW4 * C8 * 2           # theta + pooled-phi blocks
            + 2 * HW4 * C2 * 2         # pooled-g block
            + 2 * HW4 * C * 2          # residual x block
            + 2 * C2 * C * 2           # (gamma*w_o)^T
            + 2 * HW4 * C * 4          # out block (f32, double buffered)
            + 2 * HW4 * HW4 * 4        # s / exp temporaries
            + HW4 * C2 * 4 + HW4 * C * 4)
    out_perm = pl.pallas_call(
        _make_attention_kernel(_use_bf16_exp()),
        out_shape=jax.ShapeDtypeStruct((B, HW, C), x.dtype),
        grid=(B, 4),
        in_specs=[pl.BlockSpec((1, HW4, C8), lambda b, k: (b, k, 0)),  # theta
                  pl.BlockSpec((1, HW4, C8), lambda b, k: (b, 0, 0)),  # pooled phi
                  pl.BlockSpec((1, HW4, C2), lambda b, k: (b, 0, 0)),  # pooled g
                  pl.BlockSpec((1, HW4, C), lambda b, k: (b, k, 0)),   # residual x
                  pl.BlockSpec((C2, C), lambda b, k: (0, 0))],         # (gamma*w_o)^T
        out_specs=pl.BlockSpec((1, HW4, C), lambda b, k: (b, k, 0)),
        compiler_params=pltpu.CompilerParams(
            dimension_semantics=("parallel", "parallel"),
            vmem_limit_bytes=_vmem_limit(est2)),
        cost_estimate=pl.CostEstimate(
            flops=2 * B * (HW * HW4 * (C8 + C2) + HW * C2 * C),
            transcendentals=B * HW * HW4,
            bytes_accessed=B * (HW * C8 * 2 + HW4 * (C8 + C2) * 2
                                + HW * C * 2 + HW * C * 4) + C2 * C * 2),
    )(theta, phi_p, g_p, xw, wog)

    # Undo the pool-window-major permutation -> NCHW.
    out = out_perm.reshape(B, 2, 2, H2, W2, C).transpose(0, 5, 3, 1, 4, 2)
    return out.reshape(B, C, H, W)


# ------------------------- pure-JAX reference ------------------------------
def attention_reference(x, w_theta, w_phi, w_g, w_o, gamma):
    B, C, H, W = x.shape

    def conv1x1(w, t):
        return jnp.einsum('oc,bchw->bohw', w, t)

    def maxpool2(t):
        Bn, Cn, Hn, Wn = t.shape
        return t.reshape(Bn, Cn, Hn // 2, 2, Wn // 2, 2).max(axis=(3, 5))

    theta = conv1x1(w_theta, x).reshape(B, C // 8, -1)
    phi = maxpool2(conv1x1(w_phi, x)).reshape(B, C // 8, -1)
    g = maxpool2(conv1x1(w_g, x)).reshape(B, C // 2, -1)
    s = jnp.einsum('bcq,bck->bqk', theta, phi)
    beta = jax.nn.softmax(s, axis=-1)
    o = jnp.einsum('bck,bqk->bcq', g, beta).reshape(B, C // 2, H, W)
    o = conv1x1(w_o, o)
    return gamma * o + x


# ------------------------- deterministic weight init ------------------------
def orthogonal(key, out_c, in_c):
    # Orthogonal init (like nn.init.orthogonal_).  spectral_norm is then the
    # identity reparameterization (all singular values == 1), so it is
    # absorbed here rather than replicated as a power iteration.
    a = jax.random.normal(key, (max(out_c, in_c), min(out_c, in_c)), jnp.float32)
    q, r = jnp.linalg.qr(a)
    q = q * jnp.sign(jnp.diagonal(r))
    w = q.T if out_c < in_c else q
    return w.astype(jnp.float32)      # (out_c, in_c)


if __name__ == "__main__":
    key = jax.random.PRNGKey(0)
    B, C, H, W = 2, 32, 16, 16        # channels//8 = 4, channels//2 = 16
    kx, k1, k2, k3, k4 = jax.random.split(key, 5)
    x = jax.random.normal(kx, (B, C, H, W), jnp.float32)
    w_theta = orthogonal(k1, C // 8, C)
    w_phi = orthogonal(k2, C // 8, C)
    w_g = orthogonal(k3, C // 2, C)
    w_o = orthogonal(k4, C, C // 2)
    # PyTorch inits gamma to 0.0 (output == input); use a nonzero deterministic
    # value so the attention path is actually exercised.  Forward semantics
    # (gamma * o + x) are unchanged.
    gamma = 0.5

    out = jax.block_until_ready(
        attention_forward(x, w_theta, w_phi, w_g, w_o, gamma))
    ref = attention_reference(x, w_theta, w_phi, w_g, w_o, gamma)
    assert out.shape == (B, C, H, W)
    # bf16 MXU operands / bf16 exp / bf16 residual with f32 accumulation
    # -> looser tolerance.
    np.testing.assert_allclose(np.asarray(out), np.asarray(ref),
                               rtol=5e-2, atol=5e-2)
    print("KERNEL_OK")
</pallas_src>

<mosaic_0001>
module attributes {stable_mosaic.version = 11 : i64} {
  func.func @kernel(%arg0: i32, %arg1: i32, %arg2: memref<1x64x4xbf16, #tpu.memory_space<vmem>>, %arg3: memref<1x64x4xbf16, #tpu.memory_space<vmem>>, %arg4: memref<1x64x16xbf16, #tpu.memory_space<vmem>>, %arg5: memref<1x64x32xbf16, #tpu.memory_space<vmem>>, %arg6: memref<16x32xbf16, #tpu.memory_space<vmem>>, %arg7: memref<1x64x32xf32, #tpu.memory_space<vmem>>) attributes {dimension_semantics = [#tpu.dimension_semantics<parallel>, #tpu.dimension_semantics<parallel>], iteration_bounds = array<i64: 2, 4>, scalar_prefetch = 0 : i64, scratch_operands = 0 : i64, tpu.core_type = #tpu.core_type<tc>, window_params = [{transform_indices = @transform_0, window_bounds = array<i64: 1, 64, 4>}, {transform_indices = @transform_1, window_bounds = array<i64: 1, 64, 4>}, {transform_indices = @transform_2, window_bounds = array<i64: 1, 64, 16>}, {transform_indices = @transform_3, window_bounds = array<i64: 1, 64, 32>}, {pipeline_mode = #tpu.pipeline_mode<synchronous>, transform_indices = @transform_4, window_bounds = array<i64: 16, 32>}, {transform_indices = @transform_5, window_bounds = array<i64: 1, 64, 32>}]} {
    %c0 = arith.constant 0 : index
    %c0_0 = arith.constant 0 : index
    %c0_1 = arith.constant 0 : index
    %0 = vector.load %arg2[%c0, %c0_0, %c0_1] : memref<1x64x4xbf16, #tpu.memory_space<vmem>>, vector<1x64x4xbf16>
    %1 = vector.shape_cast %0 : vector<1x64x4xbf16> to vector<64x4xbf16>
    %c0_2 = arith.constant 0 : index
    %c0_3 = arith.constant 0 : index
    %c0_4 = arith.constant 0 : index
    %2 = vector.load %arg3[%c0_2, %c0_3, %c0_4] : memref<1x64x4xbf16, #tpu.memory_space<vmem>>, vector<1x64x4xbf16>
    %3 = vector.shape_cast %2 : vector<1x64x4xbf16> to vector<64x4xbf16>
    %cst = arith.constant dense<0.000000e+00> : vector<64x64xf32>
    %4 = tpu.matmul %1, %3, %cst {dimension_numbers = #tpu.dot_dimension_numbers<[1], [1], [0], [0], [0, 0, 1, 0], [], []>} : vector<64x4xbf16>, vector<64x4xbf16>, vector<64x64xf32> -> vector<64x64xf32>
    %cst_5 = arith.constant dense<0xFF800000> : vector<64xf32>
    %5 = vector.multi_reduction <maximumf>, %4, %cst_5 [1] : vector<64x64xf32> to vector<64xf32>
    %6 = vector.shape_cast %5 : vector<64xf32> to vector<64x1xf32>
    %7 = vector.broadcast %6 : vector<64x1xf32> to vector<64x64xf32>
    %8 = arith.subf %4, %7 : vector<64x64xf32>
    %9 = arith.truncf %8 : vector<64x64xf32> to vector<64x64xbf16>
    %10 = math.exp %9 : vector<64x64xbf16>
    %11 = arith.extf %10 : vector<64x64xbf16> to vector<64x64xf32>
    %cst_6 = arith.constant dense<0.000000e+00> : vector<64xf32>
    %12 = vector.multi_reduction <add>, %11, %cst_6 [1] : vector<64x64xf32> to vector<64xf32>
    %13 = vector.shape_cast %12 : vector<64xf32> to vector<64x1xf32>
    %c0_7 = arith.constant 0 : index
    %c0_8 = arith.constant 0 : index
    %c0_9 = arith.constant 0 : index
    %14 = vector.load %arg4[%c0_7, %c0_8, %c0_9] : memref<1x64x16xbf16, #tpu.memory_space<vmem>>, vector<1x64x16xbf16>
    %15 = vector.shape_cast %14 : vector<1x64x16xbf16> to vector<64x16xbf16>
    %cst_10 = arith.constant dense<0.000000e+00> : vector<64x16xf32>
    %16 = tpu.matmul %10, %15, %cst_10 {dimension_numbers = #tpu.dot_dimension_numbers<[1], [0], [0], [1], [0, 0, 1, 1], [], []>} : vector<64x64xbf16>, vector<64x16xbf16>, vector<64x16xf32> -> vector<64x16xf32>
    %17 = tpu.reciprocal %13 {approx = true} : vector<64x1xf32> -> vector<64x1xf32>
    %18 = vector.broadcast %17 : vector<64x1xf32> to vector<64x16xf32>
    %19 = arith.mulf %16, %18 : vector<64x16xf32>
    %20 = arith.truncf %19 : vector<64x16xf32> to vector<64x16xbf16>
    %c0_11 = arith.constant 0 : index
    %c0_12 = arith.constant 0 : index
    %21 = vector.load %arg6[%c0_11, %c0_12] : memref<16x32xbf16, #tpu.memory_space<vmem>>, vector<16x32xbf16>
    %cst_13 = arith.constant dense<0.000000e+00> : vector<64x32xf32>
    %22 = tpu.matmul %20, %21, %cst_13 {dimension_numbers = #tpu.dot_dimension_numbers<[1], [0], [0], [1], [0, 0, 1, 1], [], []>} : vector<64x16xbf16>, vector<16x32xbf16>, vector<64x32xf32> -> vector<64x32xf32>
    %c0_14 = arith.constant 0 : index
    %c0_15 = arith.constant 0 : index
    %c0_16 = arith.constant 0 : index
    %23 = vector.load %arg5[%c0_14, %c0_15, %c0_16] : memref<1x64x32xbf16, #tpu.memory_space<vmem>>, vector<1x64x32xbf16>
    %24 = vector.shape_cast %23 : vector<1x64x32xbf16> to vector<64x32xbf16>
    %25 = arith.extf %24 : vector<64x32xbf16> to vector<64x32xf32>
    %26 = arith.addf %22, %25 : vector<64x32xf32>
    %c0_17 = arith.constant 0 : index
    %c0_18 = arith.constant 0 : index
    %c0_19 = arith.constant 0 : index
    %27 = vector.load %arg7[%c0_17, %c0_18, %c0_19] : memref<1x64x32xf32, #tpu.memory_space<vmem>>, vector<1x64x32xf32>
    %28 = vector.shape_cast %27 : vector<1x64x32xf32> to vector<64x32xf32>
    %29 = vector.shape_cast %26 : vector<64x32xf32> to vector<1x64x32xf32>
    tpu.vector_store %arg7[%c0_17, %c0_18, %c0_19], %29 {strides = array<i32>} : memref<1x64x32xf32, #tpu.memory_space<vmem>>, vector<1x64x32xf32>,
    return
  }
  func.func @transform_0(%arg0: i32, %arg1: i32) -> (i32, i32, i32) {
    %c0_i32 = arith.constant 0 : i32
    %c0_i32_0 = arith.constant 0 : i32
    return %arg0, %arg1, %c0_i32 : i32, i32, i32
  }
  func.func @transform_1(%arg0: i32, %arg1: i32) -> (i32, i32, i32) {
    %c0_i32 = arith.constant 0 : i32
    %c0_i32_0 = arith.constant 0 : i32
    %c0_i32_1 = arith.constant 0 : i32
    return %arg0, %c0_i32, %c0_i32_0 : i32, i32, i32
  }
  func.func @transform_2(%arg0: i32, %arg1: i32) -> (i32, i32, i32) {
    %c0_i32 = arith.constant 0 : i32
    %c0_i32_0 = arith.constant 0 : i32
    %c0_i32_1 = arith.constant 0 : i32
    return %arg0, %c0_i32, %c0_i32_0 : i32, i32, i32
  }
  func.func @transform_3(%arg0: i32, %arg1: i32) -> (i32, i32, i32) {
    %c0_i32 = arith.constant 0 : i32
    %c0_i32_0 = arith.constant 0 : i32
    return %arg0, %arg1, %c0_i32 : i32, i32, i32
  }
  func.func @transform_4(%arg0: i32, %arg1: i32) -> (i32, i32) {
    %c0_i32 = arith.constant 0 : i32
    %c0_i32_0 = arith.constant 0 : i32
    %c0_i32_1 = arith.constant 0 : i32
    return %c0_i32, %c0_i32_0 : i32, i32
  }
  func.func @transform_5(%arg0: i32, %arg1: i32) -> (i32, i32, i32) {
    %c0_i32 = arith.constant 0 : i32
    %c0_i32_0 = arith.constant 0 : i32
    return %arg0, %arg1, %c0_i32 : i32, i32, i32
  }
}

module attributes {stable_mosaic.version = 11 : i64} {
  func.func @_proj_pool_kernel(%arg0: i32, %arg1: i32, %arg2: memref<1x64x32xbf16, #tpu.memory_space<vmem>>, %arg3: memref<32x24xbf16, #tpu.memory_space<vmem>>, %arg4: memref<1x64x4xbf16, #tpu.memory_space<vmem>>, %arg5: memref<1x64x4xbf16, #tpu.memory_space<vmem>>, %arg6: memref<1x64x16xbf16, #tpu.memory_space<vmem>>) attributes {dimension_semantics = [#tpu.dimension_semantics<parallel>, #tpu.dimension_semantics<arbitrary>], iteration_bounds = array<i64: 2, 4>, scalar_prefetch = 0 : i64, scratch_operands = 0 : i64, tpu.core_type = #tpu.core_type<tc>, window_params = [{transform_indices = @transform_0, window_bounds = array<i64: 1, 64, 32>}, {pipeline_mode = #tpu.pipeline_mode<synchronous>, transform_indices = @transform_1, window_bounds = array<i64: 32, 24>}, {transform_indices = @transform_2, window_bounds = array<i64: 1, 64, 4>}, {transform_indices = @transform_3, window_bounds = array<i64: 1, 64, 4>}, {transform_indices = @transform_4, window_bounds = array<i64: 1, 64, 16>}]} {
    %c0 = arith.constant 0 : index
    %c0_0 = arith.constant 0 : index
    %c0_1 = arith.constant 0 : index
    %0 = vector.load %arg2[%c0, %c0_0, %c0_1] : memref<1x64x32xbf16, #tpu.memory_space<vmem>>, vector<1x64x32xbf16>
    %1 = vector.shape_cast %0 : vector<1x64x32xbf16> to vector<64x32xbf16>
    %c0_2 = arith.constant 0 : index
    %c0_3 = arith.constant 0 : index
    %2 = vector.load %arg3[%c0_2, %c0_3] : memref<32x24xbf16, #tpu.memory_space<vmem>>, vector<32x24xbf16>
    %cst = arith.constant dense<0.000000e+00> : vector<64x24xf32>
    %3 = tpu.matmul %1, %2, %cst {dimension_numbers = #tpu.dot_dimension_numbers<[1], [0], [0], [1], [0, 0, 1, 1], [], []>} : vector<64x32xbf16>, vector<32x24xbf16>, vector<64x24xf32> -> vector<64x24xf32>
    %4 = vector.extract_strided_slice %3 {offsets = [0, 0], sizes = [64, 4], strides = [1, 1]} : vector<64x24xf32> to vector<64x4xf32>
    %5 = arith.truncf %4 : vector<64x4xf32> to vector<64x4xbf16>
    %c0_4 = arith.constant 0 : index
    %c0_5 = arith.constant 0 : index
    %c0_6 = arith.constant 0 : index
    %6 = vector.load %arg4[%c0_4, %c0_5, %c0_6] : memref<1x64x4xbf16, #tpu.memory_space<vmem>>, vector<1x64x4xbf16>
    %7 = vector.shape_cast %6 : vector<1x64x4xbf16> to vector<64x4xbf16>
    %8 = vector.shape_cast %5 : vector<64x4xbf16> to vector<1x64x4xbf16>
    tpu.vector_store %arg4[%c0_4, %c0_5, %c0_6], %8 {strides = array<i32>} : memref<1x64x4xbf16, #tpu.memory_space<vmem>>, vector<1x64x4xbf16>,
    %9 = vector.extract_strided_slice %3 {offsets = [0, 4], sizes = [64, 4], strides = [1, 1]} : vector<64x24xf32> to vector<64x4xf32>
    %10 = arith.truncf %9 : vector<64x4xf32> to vector<64x4xbf16>
    %11 = vector.extract_strided_slice %3 {offsets = [0, 8], sizes = [64, 16], strides = [1, 1]} : vector<64x24xf32> to vector<64x16xf32>
    %12 = arith.truncf %11 : vector<64x16xf32> to vector<64x16xbf16>
    %c0_i32 = arith.constant 0 : i32
    %13 = arith.cmpi eq, %arg1, %c0_i32 : i32
    %14 = arith.extui %13 : i1 to i32
    %c0_i32_7 = arith.constant 0 : i32
    %15 = arith.cmpi ne, %14, %c0_i32_7 : i32
    scf.if %15 {
      %c0_10 = arith.constant 0 : index
      %c0_11 = arith.constant 0 : index
      %c0_12 = arith.constant 0 : index
      %19 = vector.load %arg5[%c0_10, %c0_11, %c0_12] : memref<1x64x4xbf16, #tpu.memory_space<vmem>>, vector<1x64x4xbf16>
      %20 = vector.shape_cast %19 : vector<1x64x4xbf16> to vector<64x4xbf16>
      %21 = vector.shape_cast %10 : vector<64x4xbf16> to vector<1x64x4xbf16>
      tpu.vector_store %arg5[%c0_10, %c0_11, %c0_12], %21 {strides = array<i32>} : memref<1x64x4xbf16, #tpu.memory_space<vmem>>, vector<1x64x4xbf16>,
      %c0_13 = arith.constant 0 : index
      %c0_14 = arith.constant 0 : index
      %c0_15 = arith.constant 0 : index
      %22 = vector.load %arg6[%c0_13, %c0_14, %c0_15] : memref<1x64x16xbf16, #tpu.memory_space<vmem>>, vector<1x64x16xbf16>
      %23 = vector.shape_cast %22 : vector<1x64x16xbf16> to vector<64x16xbf16>
      %24 = vector.shape_cast %12 : vector<64x16xbf16> to vector<1x64x16xbf16>
      tpu.vector_store %arg6[%c0_13, %c0_14, %c0_15], %24 {strides = array<i32>} : memref<1x64x16xbf16, #tpu.memory_space<vmem>>, vector<1x64x16xbf16>,
    } else {
    }
    %c0_i32_8 = arith.constant 0 : i32
    %16 = arith.cmpi sgt, %arg1, %c0_i32_8 : i32
    %17 = arith.extui %16 : i1 to i32
    %c0_i32_9 = arith.constant 0 : i32
    %18 = arith.cmpi ne, %17, %c0_i32_9 : i32
    scf.if %18 {
      %c0_10 = arith.constant 0 : index
      %c0_11 = arith.constant 0 : index
      %c0_12 = arith.constant 0 : index
      %19 = vector.load %arg5[%c0_10, %c0_11, %c0_12] : memref<1x64x4xbf16, #tpu.memory_space<vmem>>, vector<1x64x4xbf16>
      %20 = vector.shape_cast %19 : vector<1x64x4xbf16> to vector<64x4xbf16>
      %21 = arith.maximumf %20, %10 : vector<64x4xbf16>
      %c0_13 = arith.constant 0 : index
      %c0_14 = arith.constant 0 : index
      %c0_15 = arith.constant 0 : index
      %22 = vector.load %arg5[%c0_13, %c0_14, %c0_15] : memref<1x64x4xbf16, #tpu.memory_space<vmem>>, vector<1x64x4xbf16>
      %23 = vector.shape_cast %22 : vector<1x64x4xbf16> to vector<64x4xbf16>
      %24 = vector.shape_cast %21 : vector<64x4xbf16> to vector<1x64x4xbf16>
      tpu.vector_store %arg5[%c0_13, %c0_14, %c0_15], %24 {strides = array<i32>} : memref<1x64x4xbf16, #tpu.memory_space<vmem>>, vector<1x64x4xbf16>,
      %c0_16 = arith.constant 0 : index
      %c0_17 = arith.constant 0 : index
      %c0_18 = arith.constant 0 : index
      %25 = vector.load %arg6[%c0_16, %c0_17, %c0_18] : memref<1x64x16xbf16, #tpu.memory_space<vmem>>, vector<1x64x16xbf16>
      %26 = vector.shape_cast %25 : vector<1x64x16xbf16> to vector<64x16xbf16>
      %27 = arith.maximumf %26, %12 : vector<64x16xbf16>
      %c0_19 = arith.constant 0 : index
      %c0_20 = arith.constant 0 : index
      %c0_21 = arith.constant 0 : index
      %28 = vector.load %arg6[%c0_19, %c0_20, %c0_21] : memref<1x64x16xbf16, #tpu.memory_space<vmem>>, vector<1x64x16xbf16>
      %29 = vector.shape_cast %28 : vector<1x64x16xbf16> to vector<64x16xbf16>
      %30 = vector.shape_cast %27 : vector<64x16xbf16> to vector<1x64x16xbf16>
      tpu.vector_store %arg6[%c0_19, %c0_20, %c0_21], %30 {strides = array<i32>} : memref<1x64x16xbf16, #tpu.memory_space<vmem>>, vector<1x64x16xbf16>,
    } else {
    }
    return
  }
  func.func @transform_0(%arg0: i32, %arg1: i32) -> (i32, i32, i32) {
    %c0_i32 = arith.constant 0 : i32
    %c0_i32_0 = arith.constant 0 : i32
    return %arg0, %arg1, %c0_i32 : i32, i32, i32
  }
  func.func @transform_1(%arg0: i32, %arg1: i32) -> (i32, i32) {
    %c0_i32 = arith.constant 0 : i32
    %c0_i32_0 = arith.constant 0 : i32
    %c0_i32_1 = arith.constant 0 : i32
    return %c0_i32, %c0_i32_0 : i32, i32
  }
  func.func @transform_2(%arg0: i32, %arg1: i32) -> (i32, i32, i32) {
    %c0_i32 = arith.constant 0 : i32
    %c0_i32_0 = arith.constant 0 : i32
    return %arg0, %arg1, %c0_i32 : i32, i32, i32
  }
  func.func @transform_3(%arg0: i32, %arg1: i32) -> (i32, i32, i32) {
    %c0_i32 = arith.constant 0 : i32
    %c0_i32_0 = arith.constant 0 : i32
    %c0_i32_1 = arith.constant 0 : i32
    return %arg0, %c0_i32, %c0_i32_0 : i32, i32, i32
  }
  func.func @transform_4(%arg0: i32, %arg1: i32) -> (i32, i32, i32) {
    %c0_i32 = arith.constant 0 : i32
    %c0_i32_0 = arith.constant 0 : i32
    %c0_i32_1 = arith.constant 0 : i32
    return %arg0, %c0_i32, %c0_i32_0 : i32, i32, i32
  }
}

</mosaic_0001>

<llo_original>
// kernel: attention_forward.2
$region0: #{attention_forward.2}
  #allocation0 [shape = 'u32[]', space=smem, size = 0x4, offset = 0x4, fixed_abs, tag = 'smem constant byte address 0x4 - core index']
  #allocation1 [shape = 'u32[72,128]{1,0:T(1,128)}', space=vmem, size = 0x9000, scoped, tag = 'internal scratch']
  %s0 = inlined_call_operand.vmem [shape: bf16[2,256,32], index: 0, kind: input, shape index: {}]
  %s1 = inlined_call_operand.vmem [shape: bf16[32,24], index: 1, kind: input, shape index: {}]
  %s2 = inlined_call_operand.vmem [shape: bf16[2,256,4], index: 2, kind: output, shape index: {0}]
  %s3 = inlined_call_operand.vmem [shape: bf16[2,64,4], index: 3, kind: output, shape index: {1}]
  %s4 = inlined_call_operand.vmem [shape: bf16[2,64,16], index: 4, kind: output, shape index: {2}]
  %5 = xla_tuple %s2, %s3, %s4
  %s6 = sld [smem:[#allocation0]]
  $region65: #{attention_forward.2} parent=0
    _
  %s8 = ssub.s32 1, %s6
  %s9 = scalar_select 0, %s8, %s6
  loop: start=0, step=1, limit=10
  $region2: #{attention_forward.2} parent=0 // loop_pre_header
    _
  $region3: #{attention_forward.2} parent=0 // loop_header
    %s11 = sphi 0, %s15
    %p12 = scmp.ge.s32.totalorder %s11, 10
    %s18 = sphi 0, %s30
    %s19 = sphi 0, %s26
    %s20 = sphi 0, %s18
    %s21 = sphi 0, %s19
    %s22 = sphi 0, %s20
    %s23 = sphi 0, %s21
    %s35 = sphi 0, %s37
    %s38 = sphi 0, %s35
    %s39 = sphi 0, %s38
    %s55 = sphi 0, %s39
    %s59 = sphi 0, %s59
    %s61 = sphi 0, %s59
    %s62 = sphi 0, %s61
    %s76 = sphi 0, %s62
    %s84 = sphi 0, %s86
    %s87 = sphi 0, %s84
    %s88 = sphi 0, %s87
    %s104 = sphi 0, %s88
    %s110 = sphi 0, %s112
    %s113 = sphi 0, %s110
    %s114 = sphi 0, %s113
    %s130 = sphi 0, %s114
    %s136 = sphi 0, %s138
    %s139 = sphi 0, %s136
    %s140 = sphi 0, %s139
    %s156 = sphi 0, %s140
  $region4: #{attention_forward.2} parent=0 // loop_header_branch
    %14 = sbr.rel (%p12) target = $region8
  $region5: #{attention_forward.2} parent=0 // loop_body
    %s16 = ssub.s32 %s11, 1
    %s17 = ssub.s32 %s11, 2
    %s24 = sadd.s32 1, %s19
    %p25 = scmp.ge.s32.totalorder %s24, 4
    %s26 = scalar_select %p25, 0, %s24
    %s27 = sadd.s32 1, %s18
    %s28 = scalar_select %p25, %s27, %s18
    %p29 = scmp.ge.s32.totalorder %s28, 2
    %s30 = scalar_select %p29, 0, %s28
    %s31 = ssub.s32 %s18, %s30
    %s32 = ssub.s32 %s19, %s26
    %s33 = sor.u32 %s31, %s32
    %p34 = scmp.eq.s32.totalorder %s33, 0
    %s36 = sadd.s32 %s35, 1
    %s37 = scalar_select %p34, %s35, %s36
    %p40 = pneg %p34
    %p41 = scmp.eq.s32.totalorder %s11, 7
    %p42 = por %p40, %p41
    %p43 = scmp.ne.s32.totalorder %s35, %s38
    %p44 = scmp.eq.s32.totalorder %s11, 0
    %p45 = por %p43, %p44
    %p46 = scmp.ne.s32.totalorder %s35, %s38
    %p47 = scmp.eq.s32.totalorder %s16, 7
    %p48 = por %p46, %p47
    %p49 = scmp.ne.s32.totalorder %s38, %s39
    %p50 = scmp.eq.s32.totalorder %s16, 0
    %p51 = por %p49, %p50
    %p52 = scmp.ne.s32.totalorder %s38, %s39
    %p53 = scmp.eq.s32.totalorder %s17, 7
    %p54 = por %p52, %p53
    %p56 = scmp.ne.s32.totalorder %s39, %s55
    %p57 = scmp.eq.s32.totalorder %s17, 0
    %p58 = por %p56, %p57
    %s60 = sadd.s32 %s59, 1
    %p63 = scmp.eq.s32.totalorder %s11, 7
    %p64 = scmp.ne.s32.totalorder %s59, %s61
    %p65 = scmp.eq.s32.totalorder %s11, 0
    %p66 = por %p64, %p65
    %p67 = scmp.ne.s32.totalorder %s59, %s61
    %p68 = scmp.eq.s32.totalorder %s16, 7
    %p69 = por %p67, %p68
    %p70 = scmp.ne.s32.totalorder %s61, %s62
    %p71 = scmp.eq.s32.totalorder %s16, 0
    %p72 = por %p70, %p71
    %p73 = scmp.ne.s32.totalorder %s61, %s62
    %p74 = scmp.eq.s32.totalorder %s17, 7
    %p75 = por %p73, %p74
    %p77 = scmp.ne.s32.totalorder %s62, %s76
    %p78 = scmp.eq.s32.totalorder %s17, 0
    %p79 = por %p77, %p78
    %s80 = ssub.s32 %s18, %s30
    %s81 = ssub.s32 %s19, %s26
    %s82 = sor.u32 %s80, %s81
    %p83 = scmp.eq.s32.totalorder %s82, 0
    %s85 = sadd.s32 %s84, 1
    %s86 = scalar_select %p83, %s84, %s85
    %p89 = pneg %p83
    %p90 = scmp.eq.s32.totalorder %s11, 7
    %p91 = por %p89, %p90
    %p92 = scmp.ne.s32.totalorder %s84, %s87
    %p93 = scmp.eq.s32.totalorder %s11, 0
    %p94 = por %p92, %p93
    %p95 = scmp.ne.s32.totalorder %s84, %s87
    %p96 = scmp.eq.s32.totalorder %s16, 7
    %p97 = por %p95, %p96
    %p98 = scmp.ne.s32.totalorder %s87, %s88
    %p99 = scmp.eq.s32.totalorder %s16, 0
    %p100 = por %p98, %p99
    %p101 = scmp.ne.s32.totalorder %s87, %s88
    %p102 = scmp.eq.s32.totalorder %s17, 7
    %p103 = por %p101, %p102
    %p105 = scmp.ne.s32.totalorder %s88, %s104
    %p106 = scmp.eq.s32.totalorder %s17, 0
    %p107 = por %p105, %p106
    %s108 = ssub.s32 %s18, %s30
    %p109 = scmp.eq.s32.totalorder %s108, 0
    %s111 = sadd.s32 %s110, 1
    %s112 = scalar_select %p109, %s110, %s111
    %p115 = pneg %p109
    %p116 = scmp.eq.s32.totalorder %s11, 7
    %p117 = por %p115, %p116
    %p118 = scmp.ne.s32.totalorder %s110, %s113
    %p119 = scmp.eq.s32.totalorder %s11, 0
    %p120 = por %p118, %p119
    %p121 = scmp.ne.s32.totalorder %s110, %s113
    %p122 = scmp.eq.s32.totalorder %s16, 7
    %p123 = por %p121, %p122
    %p124 = scmp.ne.s32.totalorder %s113, %s114
    %p125 = scmp.eq.s32.totalorder %s16, 0
    %p126 = por %p124, %p125
    %p127 = scmp.ne.s32.totalorder %s113, %s114
    %p128 = scmp.eq.s32.totalorder %s17, 7
    %p129 = por %p127, %p128
    %p131 = scmp.ne.s32.totalorder %s114, %s130
    %p132 = scmp.eq.s32.totalorder %s17, 0
    %p133 = por %p131, %p132
    %s134 = ssub.s32 %s18, %s30
    %p135 = scmp.eq.s32.totalorder %s134, 0
    %s137 = sadd.s32 %s136, 1
    %s138 = scalar_select %p135, %s136, %s137
    %p141 = pneg %p135
    %p142 = scmp.eq.s32.totalorder %s11, 7
    %p143 = por %p141, %p142
    %p144 = scmp.ne.s32.totalorder %s136, %s139
    %p145 = scmp.eq.s32.totalorder %s11, 0
    %p146 = por %p144, %p145
    %p147 = scmp.ne.s32.totalorder %s136, %s139
    %p148 = scmp.eq.s32.totalorder %s16, 7
    %p149 = por %p147, %p148
    %p150 = scmp.ne.s32.totalorder %s139, %s140
    %p151 = scmp.eq.s32.totalorder %s16, 0
    %p152 = por %p150, %p151
    %p153 = scmp.ne.s32.totalorder %s139, %s140
    %p154 = scmp.eq.s32.totalorder %s17, 7
    %p155 = por %p153, %p154
    %p157 = scmp.ne.s32.totalorder %s140, %s156
    %p158 = scmp.eq.s32.totalorder %s17, 0
    %p159 = por %p157, %p158
    %p160 = scmp.le.s32.totalorder 1, %s11
    %p161 = scmp.lt.s32.totalorder %s11, 9
    %p162 = pnand %p160, %p161
    %p163 = pneg %p162
    // Predicated region
    $region9: #{attention_forward.2} parent=5 // pred_check
      _
    $region10: #{attention_forward.2} parent=5 // pred_check_branch
      %165 = sbr.rel (%p162) target = $region12
    $region11: #{attention_forward.2} parent=5 // pred_region
      %s166 = ssub.s32 %s11, 1
      // Predicated region
      $region13: #{attention_forward.2} parent=11 // pred_check
        %p167 = pneg %p72
      $region14: #{attention_forward.2} parent=11 // pred_check_branch
        %169 = sbr.rel (%p167) target = $region16
      $region15: #{attention_forward.2} parent=11 // pred_region
        _
      $region16: #{attention_forward.2} parent=11 // pred_fallthru
        _
    $region12: #{attention_forward.2} parent=5 // pred_fallthru
      _
    %p170 = scmp.lt.s32.totalorder %s11, 8
    // Predicated region
    $region17: #{attention_forward.2} parent=5 // pred_check
      %p171 = pneg %p170
    $region18: #{attention_forward.2} parent=5 // pred_check_branch
      %173 = sbr.rel (%p171) target = $region20
    $region19: #{attention_forward.2} parent=5 // pred_region
      // Predicated region
      $region21: #{attention_forward.2} parent=19 // pred_check
        %p174 = pneg %p45
      $region22: #{attention_forward.2} parent=19 // pred_check_branch
        %176 = sbr.rel (%p174) target = $region24
      $region23: #{attention_forward.2} parent=19 // pred_region
        %s177 = smul.u32 8, %s19
        %p178 = scmp.lt.s32.totalorder %s18, 1
        %s179 = scalar_select %p178, %s18, 1
        %p180 = scmp.lt.s32.totalorder %s177, 31
        %s181 = scalar_select %p180, %s177, 31
        %s182 = smul.addr %s179, 32
        %s183 = sadd.s32 %s181, %s182
        %s184 = smul.addr %s183, 4
        %s185 = scalar_lea.vmem %s0, %s184
        %s186 = smul.u32 8, %s19
      $region24: #{attention_forward.2} parent=19 // pred_fallthru
        _
    $region20: #{attention_forward.2} parent=5 // pred_fallthru
      _
    %p187 = scmp.le.s32.totalorder 1, %s11
    %p188 = scmp.lt.s32.totalorder %s11, 9
    %p189 = pnand %p187, %p188
    %p190 = pneg %p189
    // Predicated region
    $region25: #{attention_forward.2} parent=5 // pred_check
      _
    $region26: #{attention_forward.2} parent=5 // pred_check_branch
      %192 = sbr.rel (%p189) target = $region28
    $region27: #{attention_forward.2} parent=5 // pred_region
      %s193 = ssub.s32 %s11, 1
      %s194 = smul.u32 8, %s21
      %p195 = scmp.lt.s32.totalorder %s20, 1
      %s196 = scalar_select %p195, %s20, 1
      %p197 = scmp.lt.s32.totalorder %s194, 31
      %s198 = scalar_select %p197, %s194, 31
      %s199 = smul.addr %s196, 32
      %s200 = sadd.s32 %s198, %s199
      %s201 = smul.addr %s200, 4
      %s202 = scalar_lea.vmem %s0, %s201
      %p203 = pneg %p51
      %p204 = pneg %p48
      %p205 = pneg %p72
      %p206 = pneg %p69
      %p207 = pneg %p100
      %p208 = pneg %p97
      %s209 = smul.u32 8, %s21
      %p210 = scmp.lt.s32.totalorder %s20, 1
      %s211 = scalar_select %p210, %s20, 1
      %p212 = scmp.lt.s32.totalorder %s209, 31
      %s213 = scalar_select %p212, %s209, 31
      %s214 = smul.addr %s211, 32
      %s215 = sadd.s32 %s213, %s214
      %s216 = smul.addr %s215, 4
      %s217 = scalar_lea.vmem %s2, %s216
      %p218 = pneg %p126
      %p219 = pneg %p123
      %p220 = scmp.lt.s32.totalorder %s20, 1
      %s221 = scalar_select %p220, %s20, 1
      %s222 = smul.addr %s221, 8
      %s223 = smul.addr %s222, 4
      %s224 = scalar_lea.vmem %s3, %s223
      %p225 = pneg %p152
      %p226 = pneg %p149
      %p227 = scmp.lt.s32.totalorder %s20, 1
      %s228 = scalar_select %p227, %s20, 1
      %s229 = smul.addr %s228, 8
      %s230 = smul.addr %s229, 4
      %s231 = scalar_lea.vmem %s4, %s230
      %s232 = smul.u32 8, %s21
      %p233 = scmp.lt.s32.totalorder %s20, 1
      %s234 = scalar_select %p233, %s20, 1
      %p235 = scmp.lt.s32.totalorder %s232, 31
      %s236 = scalar_select %p235, %s232, 31
      %s237 = smul.addr %s234, 32
      %s238 = sadd.s32 %s236, %s237
      %s239 = smul.addr %s238, 4
      %s240 = scalar_lea.vmem %s0, %s239
      %s241 = smul.u32 8, %s21
      %s242 = smul.u32 8, %s21
      %p243 = scmp.lt.s32.totalorder %s20, 1
      %s244 = scalar_select %p243, %s20, 1
      %p245 = scmp.lt.s32.totalorder %s242, 31
      %s246 = scalar_select %p245, %s242, 31
      %s247 = smul.addr %s244, 32
      %s248 = sadd.s32 %s246, %s247
      %s249 = smul.addr %s248, 4
      %s250 = scalar_lea.vmem %s2, %s249
      %s251 = smul.u32 8, %s21
      %p252 = scmp.lt.s32.totalorder %s20, 1
      %s253 = scalar_select %p252, %s20, 1
      %s254 = smul.addr %s253, 8
      %s255 = smul.addr %s254, 4
      %s256 = scalar_lea.vmem %s3, %s255
      %p257 = scmp.lt.s32.totalorder %s20, 1
      %s258 = scalar_select %p257, %s20, 1
      %s259 = smul.addr %s258, 8
      %s260 = smul.addr %s259, 4
      %s261 = scalar_lea.vmem %s4, %s260
      %v263 = vld [vmem:[%s240] sm:$0xf]
      %v264 = vld [vmem:[%s240 + $0x4] sm:$0xf]
      %v265 = vld [vmem:[%s240 + $0x8] sm:$0xf]
      %v266 = vld [vmem:[%s240 + $0xc] sm:$0xf]
      %v267 = vld [vmem:[%s240 + $0x10] sm:$0xf]
      %v268 = vld [vmem:[%s240 + $0x14] sm:$0xf]
      %v269 = vld [vmem:[%s240 + $0x18] sm:$0xf]
      %v270 = vld [vmem:[%s240 + $0x1c] sm:$0xf]
      %v271 = vld [vmem:[%s1] sm:$0xf]
      %v272 = vld [vmem:[%s1 + $0x4] sm:$0xf]
      %v273 = vld [vmem:[%s1 + $0x8] sm:$0xf]
      %v274 = vld [vmem:[%s1 + $0xc] sm:$0xf]
      %v283 = vunpack.c.l.b16 %v263
      %v284 = vunpack.c.l.b16 %v264
      %v285 = vunpack.c.l.b16 %v265
      %v286 = vunpack.c.l.b16 %v266
      %v287 = vunpack.c.l.b16 %v267
      %v288 = vunpack.c.l.b16 %v268
      %v289 = vunpack.c.l.b16 %v269
      %v290 = vunpack.c.l.b16 %v270
      %v291 = vpack.c.b16 %v284, %v283
      %v292 = vpack.c.b16 %v286, %v285
      %v293 = vpack.c.b16 %v288, %v287
      %v294 = vpack.c.b16 %v290, %v289
      %v299 = vunpack.c.l.b16 %v271
      %v300 = vunpack.c.l.b16 %v272
      %v301 = vunpack.c.l.b16 %v273
      %v302 = vunpack.c.l.b16 %v274
      %v303 = vpack.c.b16 %v300, %v299
      %v304 = vpack.c.b16 %v302, %v301
      %vm307 = vcmask 261120
      %v309 = vsel %vm307, %v291, 0
      %v312 = vsel %vm307, %v292, 0
      %v315 = vsel %vm307, %v293, 0
      %v318 = vsel %vm307, %v294, 0
      %320 = vmatpush.bf16.msra.mxu0 0
      %321 = vmatpush.bf16.msra.mxu0 0
      %322 = vmatpush.bf16.msra.mxu0 0
      %323 = vmatpush.bf16.msra.mxu0 0
      %324 = vmatpush.bf16.msra.mxu0 0
      %325 = vmatpush.bf16.msra.mxu0 0
      %326 = vmatpush.bf16.msra.mxu0 %v304
      %327 = vmatpush.bf16.msra.mxu0 %v303
      %328 = vmatmul.bf16.gmra.mxu0 %v309
      %v329 = vpop.f32.mrf.mxu0
      %v330 = vadd.f32 0.0, %v329
      %v331 = vpop.f32.mrf.mxu0
      %v332 = vadd.f32 0.0, %v331
      %333 = vmatmul.bf16.gmra.mxu0 %v312
      %v334 = vpop.f32.mrf.mxu0
      %v335 = vadd.f32 0.0, %v334
      %v336 = vpop.f32.mrf.mxu0
      %v337 = vadd.f32 0.0, %v336
      %338 = vmatmul.bf16.gmra.mxu0 %v315
      %v339 = vpop.f32.mrf.mxu0
      %v340 = vadd.f32 0.0, %v339
      %v341 = vpop.f32.mrf.mxu0
      %v342 = vadd.f32 0.0, %v341
      %343 = vmatmul.bf16.gmra.mxu0 %v318
      %v344 = vpop.f32.mrf.mxu0
      %v345 = vadd.f32 0.0, %v344
      %v346 = vpop.f32.mrf.mxu0
      %v347 = vadd.f32 0.0, %v346
      %348 = vdwg.mxu0
      %v349 = vpack.c.bf16 %v330, %v330
      %v350 = vpack.c.bf16 %v332, %v332
      %v351 = vpack.c.bf16 %v335, %v335
      %v352 = vpack.c.bf16 %v337, %v337
      %v353 = vpack.c.bf16 %v340, %v340
      %v354 = vpack.c.bf16 %v342, %v342
      %v355 = vpack.c.bf16 %v345, %v345
      %v356 = vpack.c.bf16 %v347, %v347
      %vm357 = vcmask 27648
      %358 = vst.msk [vmem:[%s250] sm:$0xf] %vm357, %v349
      %359 = vst.msk [vmem:[%s250 + $0x4] sm:$0xf] %vm357, %v350
      %360 = vst.msk [vmem:[%s250 + $0x8] sm:$0xf] %vm357, %v351
      %361 = vst.msk [vmem:[%s250 + $0xc] sm:$0xf] %vm357, %v352
      %362 = vst.msk [vmem:[%s250 + $0x10] sm:$0xf] %vm357, %v353
      %363 = vst.msk [vmem:[%s250 + $0x14] sm:$0xf] %vm357, %v354
      %364 = vst.msk [vmem:[%s250 + $0x18] sm:$0xf] %vm357, %v355
      %365 = vst.msk [vmem:[%s250 + $0x1c] sm:$0xf] %vm357, %v356
      %p366 = scmp.eq.s32.totalorder %s21, 0
      // Predicated region
      $region29: #{attention_forward.2} parent=27 // pred_check
        %p367 = pneg %p366
      $region30: #{attention_forward.2} parent=27 // pred_check_branch
        %369 = sbr.rel (%p367) target = $region32
      $region31: #{attention_forward.2} parent=27 // pred_region
        %378 = vrot.lane.b32.xlu0 %v349, 124
        %v379 = vpop.permute.xlu0 %378
        %380 = vrot.lane.b32.xlu0 %v350, 124
        %v381 = vpop.permute.xlu0 %380
        %382 = vrot.lane.b32.xlu0 %v351, 124
        %v383 = vpop.permute.xlu0 %382
        %384 = vrot.lane.b32.xlu0 %v352, 124
        %v385 = vpop.permute.xlu0 %384
        %386 = vrot.lane.b32.xlu0 %v353, 124
        %v387 = vpop.permute.xlu0 %386
        %388 = vrot.lane.b32.xlu0 %v354, 124
        %v389 = vpop.permute.xlu0 %388
        %390 = vrot.lane.b32.xlu0 %v355, 124
        %v391 = vpop.permute.xlu0 %390
        %392 = vrot.lane.b32.xlu0 %v356, 124
        %v393 = vpop.permute.xlu0 %392
        %402 = vst.msk [vmem:[%s256] sm:$0xf] %vm357, %v379
        %403 = vst.msk [vmem:[%s256 + $0x4] sm:$0xf] %vm357, %v381
        %404 = vst.msk [vmem:[%s256 + $0x8] sm:$0xf] %vm357, %v383
        %405 = vst.msk [vmem:[%s256 + $0xc] sm:$0xf] %vm357, %v385
        %406 = vst.msk [vmem:[%s256 + $0x10] sm:$0xf] %vm357, %v387
        %407 = vst.msk [vmem:[%s256 + $0x14] sm:$0xf] %vm357, %v389
        %408 = vst.msk [vmem:[%s256 + $0x18] sm:$0xf] %vm357, %v391
        %409 = vst.msk [vmem:[%s256 + $0x1c] sm:$0xf] %vm357, %v393
        %410 = vrot.lane.b32.xlu0 %v349, 120
        %v411 = vpop.permute.xlu0 %410
        %412 = vrot.lane.b32.xlu0 %v350, 120
        %v413 = vpop.permute.xlu0 %412
        %414 = vrot.lane.b32.xlu0 %v351, 120
        %v415 = vpop.permute.xlu0 %414
        %416 = vrot.lane.b32.xlu0 %v352, 120
        %v417 = vpop.permute.xlu0 %416
        %418 = vrot.lane.b32.xlu0 %v353, 120
        %v419 = vpop.permute.xlu0 %418
        %420 = vrot.lane.b32.xlu0 %v354, 120
        %v421 = vpop.permute.xlu0 %420
        %422 = vrot.lane.b32.xlu0 %v355, 120
        %v423 = vpop.permute.xlu0 %422
        %424 = vrot.lane.b32.xlu0 %v356, 120
        %v425 = vpop.permute.xlu0 %424
        %vm434 = vcmask 125952
        %435 = vst.msk [vmem:[%s261] sm:$0xf] %vm434, %v411
        %436 = vst.msk [vmem:[%s261 + $0x4] sm:$0xf] %vm434, %v413
        %437 = vst.msk [vmem:[%s261 + $0x8] sm:$0xf] %vm434, %v415
        %438 = vst.msk [vmem:[%s261 + $0xc] sm:$0xf] %vm434, %v417
        %439 = vst.msk [vmem:[%s261 + $0x10] sm:$0xf] %vm434, %v419
        %440 = vst.msk [vmem:[%s261 + $0x14] sm:$0xf] %vm434, %v421
        %441 = vst.msk [vmem:[%s261 + $0x18] sm:$0xf] %vm434, %v423
        %442 = vst.msk [vmem:[%s261 + $0x1c] sm:$0xf] %vm434, %v425
      $region32: #{attention_forward.2} parent=27 // pred_fallthru
        _
      %p443 = scmp.gt.s32.totalorder %s21, 0
      // Predicated region
      $region33: #{attention_forward.2} parent=27 // pred_check
        %p444 = pneg %p443
      $region34: #{attention_forward.2} parent=27 // pred_check_branch
        %446 = sbr.rel (%p444) target = $region36
      $region35: #{attention_forward.2} parent=27 // pred_region
        %v447 = vld [vmem:[%s256] sm:$0xf]
        %v448 = vld [vmem:[%s256 + $0x4] sm:$0xf]
        %v449 = vld [vmem:[%s256 + $0x8] sm:$0xf]
        %v450 = vld [vmem:[%s256 + $0xc] sm:$0xf]
        %v451 = vld [vmem:[%s256 + $0x10] sm:$0xf]
        %v452 = vld [vmem:[%s256 + $0x14] sm:$0xf]
        %v453 = vld [vmem:[%s256 + $0x18] sm:$0xf]
        %v454 = vld [vmem:[%s256 + $0x1c] sm:$0xf]
        %v455 = vunpack.c.l.bf16 %v447
        %v456 = vunpack.c.l.bf16 %v448
        %v457 = vunpack.c.l.bf16 %v449
        %v458 = vunpack.c.l.bf16 %v450
        %v459 = vunpack.c.l.bf16 %v451
        %v460 = vunpack.c.l.bf16 %v452
        %v461 = vunpack.c.l.bf16 %v453
        %v462 = vunpack.c.l.bf16 %v454
        %v463 = vunpack.c.l.bf16 %v349
        %v464 = vunpack.c.l.bf16 %v350
        %v465 = vunpack.c.l.bf16 %v351
        %v466 = vunpack.c.l.bf16 %v352
        %v467 = vunpack.c.l.bf16 %v353
        %v468 = vunpack.c.l.bf16 %v354
        %v469 = vunpack.c.l.bf16 %v355
        %v470 = vunpack.c.l.bf16 %v356
        %479 = vrot.lane.b32.xlu0 %v463, 124
        %v480 = vpop.permute.xlu0 %479
        %481 = vrot.lane.b32.xlu0 %v464, 124
        %v482 = vpop.permute.xlu0 %481
        %483 = vrot.lane.b32.xlu0 %v465, 124
        %v484 = vpop.permute.xlu0 %483
        %485 = vrot.lane.b32.xlu0 %v466, 124
        %v486 = vpop.permute.xlu0 %485
        %487 = vrot.lane.b32.xlu0 %v467, 124
        %v488 = vpop.permute.xlu0 %487
        %489 = vrot.lane.b32.xlu0 %v468, 124
        %v490 = vpop.permute.xlu0 %489
        %491 = vrot.lane.b32.xlu0 %v469, 124
        %v492 = vpop.permute.xlu0 %491
        %493 = vrot.lane.b32.xlu0 %v470, 124
        %v494 = vpop.permute.xlu0 %493
        %v503 = vmax.f32 %v455, %v480
        %v504 = vmax.f32 %v456, %v482
        %v505 = vmax.f32 %v457, %v484
        %v506 = vmax.f32 %v458, %v486
        %v507 = vmax.f32 %v459, %v488
        %v508 = vmax.f32 %v460, %v490
        %v509 = vmax.f32 %v461, %v492
        %v510 = vmax.f32 %v462, %v494
        %v511 = vpack.c.bf16 %v503, %v503
        %v512 = vpack.c.bf16 %v504, %v504
        %v513 = vpack.c.bf16 %v505, %v505
        %v514 = vpack.c.bf16 %v506, %v506
        %v515 = vpack.c.bf16 %v507, %v507
        %v516 = vpack.c.bf16 %v508, %v508
        %v517 = vpack.c.bf16 %v509, %v509
        %v518 = vpack.c.bf16 %v510, %v510
        %519 = vst.msk [vmem:[%s256] sm:$0xf] %vm357, %v511
        %520 = vst.msk [vmem:[%s256 + $0x4] sm:$0xf] %vm357, %v512
        %521 = vst.msk [vmem:[%s256 + $0x8] sm:$0xf] %vm357, %v513
        %522 = vst.msk [vmem:[%s256 + $0xc] sm:$0xf] %vm357, %v514
        %523 = vst.msk [vmem:[%s256 + $0x10] sm:$0xf] %vm357, %v515
        %524 = vst.msk [vmem:[%s256 + $0x14] sm:$0xf] %vm357, %v516
        %525 = vst.msk [vmem:[%s256 + $0x18] sm:$0xf] %vm357, %v517
        %526 = vst.msk [vmem:[%s256 + $0x1c] sm:$0xf] %vm357, %v518
        %v527 = vld [vmem:[%s261] sm:$0xf]
        %v528 = vld [vmem:[%s261 + $0x4] sm:$0xf]
        %v529 = vld [vmem:[%s261 + $0x8] sm:$0xf]
        %v530 = vld [vmem:[%s261 + $0xc] sm:$0xf]
        %v531 = vld [vmem:[%s261 + $0x10] sm:$0xf]
        %v532 = vld [vmem:[%s261 + $0x14] sm:$0xf]
        %v533 = vld [vmem:[%s261 + $0x18] sm:$0xf]
        %v534 = vld [vmem:[%s261 + $0x1c] sm:$0xf]
        %v535 = vunpack.c.l.bf16 %v527
        %v536 = vunpack.c.l.bf16 %v528
        %v537 = vunpack.c.l.bf16 %v529
        %v538 = vunpack.c.l.bf16 %v530
        %v539 = vunpack.c.l.bf16 %v531
        %v540 = vunpack.c.l.bf16 %v532
        %v541 = vunpack.c.l.bf16 %v533
        %v542 = vunpack.c.l.bf16 %v534
        %543 = vrot.lane.b32.xlu0 %v463, 120
        %v544 = vpop.permute.xlu0 %543
        %545 = vrot.lane.b32.xlu0 %v464, 120
        %v546 = vpop.permute.xlu0 %545
        %547 = vrot.lane.b32.xlu0 %v465, 120
        %v548 = vpop.permute.xlu0 %547
        %549 = vrot.lane.b32.xlu0 %v466, 120
        %v550 = vpop.permute.xlu0 %549
        %551 = vrot.lane.b32.xlu0 %v467, 120
        %v552 = vpop.permute.xlu0 %551
        %553 = vrot.lane.b32.xlu0 %v468, 120
        %v554 = vpop.permute.xlu0 %553
        %555 = vrot.lane.b32.xlu0 %v469, 120
        %v556 = vpop.permute.xlu0 %555
        %557 = vrot.lane.b32.xlu0 %v470, 120
        %v558 = vpop.permute.xlu0 %557
        %v567 = vmax.f32 %v535, %v544
        %v568 = vmax.f32 %v536, %v546
        %v569 = vmax.f32 %v537, %v548
        %v570 = vmax.f32 %v538, %v550
        %v571 = vmax.f32 %v539, %v552
        %v572 = vmax.f32 %v540, %v554
        %v573 = vmax.f32 %v541, %v556
        %v574 = vmax.f32 %v542, %v558
        %v575 = vpack.c.bf16 %v567, %v567
        %v576 = vpack.c.bf16 %v568, %v568
        %v577 = vpack.c.bf16 %v569, %v569
        %v578 = vpack.c.bf16 %v570, %v570
        %v579 = vpack.c.bf16 %v571, %v571
        %v580 = vpack.c.bf16 %v572, %v572
        %v581 = vpack.c.bf16 %v573, %v573
        %v582 = vpack.c.bf16 %v574, %v574
        %vm583 = vcmask 125952
        %584 = vst.msk [vmem:[%s261] sm:$0xf] %vm583, %v575
        %585 = vst.msk [vmem:[%s261 + $0x4] sm:$0xf] %vm583, %v576
        %586 = vst.msk [vmem:[%s261 + $0x8] sm:$0xf] %vm583, %v577
        %587 = vst.msk [vmem:[%s261 + $0xc] sm:$0xf] %vm583, %v578
        %588 = vst.msk [vmem:[%s261 + $0x10] sm:$0xf] %vm583, %v579
        %589 = vst.msk [vmem:[%s261 + $0x14] sm:$0xf] %vm583, %v580
        %590 = vst.msk [vmem:[%s261 + $0x18] sm:$0xf] %vm583, %v581
        %591 = vst.msk [vmem:[%s261 + $0x1c] sm:$0xf] %vm583, %v582
      $region36: #{attention_forward.2} parent=27 // pred_fallthru
        _
      %s592 = smul.u32 8, %s21
      %p593 = scmp.lt.s32.totalorder %s20, 1
      %s594 = scalar_select %p593, %s20, 1
      %p595 = scmp.lt.s32.totalorder %s592, 31
      %s596 = scalar_select %p595, %s592, 31
      %s597 = smul.addr %s594, 32
      %s598 = sadd.s32 %s596, %s597
      %s599 = smul.addr %s598, 4
      %s600 = scalar_lea.vmem %s2, %s599
      %p601 = scmp.lt.s32.totalorder %s20, 1
      %s602 = scalar_select %p601, %s20, 1
      %s603 = smul.addr %s602, 8
      %s604 = smul.addr %s603, 4
      %s605 = scalar_lea.vmem %s3, %s604
      %p606 = scmp.lt.s32.totalorder %s20, 1
      %s607 = scalar_select %p606, %s20, 1
      %s608 = smul.addr %s607, 8
      %s609 = smul.addr %s608, 4
      %s610 = scalar_lea.vmem %s4, %s609
      // Predicated region
      $region37: #{attention_forward.2} parent=27 // pred_check
        %p611 = pneg %p97
      $region38: #{attention_forward.2} parent=27 // pred_check_branch
        %613 = sbr.rel (%p611) target = $region40
      $region39: #{attention_forward.2} parent=27 // pred_region
        %s614 = smul.u32 8, %s21
      $region40: #{attention_forward.2} parent=27 // pred_fallthru
        _
      // Predicated region
      $region41: #{attention_forward.2} parent=27 // pred_check
        %p615 = pneg %p123
      $region42: #{attention_forward.2} parent=27 // pred_check_branch
        %617 = sbr.rel (%p615) target = $region44
      $region43: #{attention_forward.2} parent=27 // pred_region
        _
      $region44: #{attention_forward.2} parent=27 // pred_fallthru
        _
      // Predicated region
      $region45: #{attention_forward.2} parent=27 // pred_check
        %p618 = pneg %p149
      $region46: #{attention_forward.2} parent=27 // pred_check_branch
        %620 = sbr.rel (%p618) target = $region48
      $region47: #{attention_forward.2} parent=27 // pred_region
        _
      $region48: #{attention_forward.2} parent=27 // pred_fallthru
        _
    $region28: #{attention_forward.2} parent=5 // pred_fallthru
      _
    %p621 = scmp.le.s32.totalorder 2, %s11
    // Predicated region
    $region49: #{attention_forward.2} parent=5 // pred_check
      %p622 = pneg %p621
    $region50: #{attention_forward.2} parent=5 // pred_check_branch
      %624 = sbr.rel (%p622) target = $region52
    $region51: #{attention_forward.2} parent=5 // pred_region
      %s625 = ssub.s32 %s11, 2
      // Predicated region
      $region53: #{attention_forward.2} parent=51 // pred_check
        %p626 = pneg %p103
      $region54: #{attention_forward.2} parent=51 // pred_check_branch
        %628 = sbr.rel (%p626) target = $region56
      $region55: #{attention_forward.2} parent=51 // pred_region
        %s629 = smul.u32 8, %s23
        %p630 = scmp.lt.s32.totalorder %s22, 1
        %s631 = scalar_select %p630, %s22, 1
        %p632 = scmp.lt.s32.totalorder %s629, 31
        %s633 = scalar_select %p632, %s629, 31
        %s634 = smul.addr %s631, 32
        %s635 = sadd.s32 %s633, %s634
        %s636 = smul.addr %s635, 4
        %s637 = scalar_lea.vmem %s2, %s636
      $region56: #{attention_forward.2} parent=51 // pred_fallthru
        _
      // Predicated region
      $region57: #{attention_forward.2} parent=51 // pred_check
        %p638 = pneg %p129
      $region58: #{attention_forward.2} parent=51 // pred_check_branch
        %640 = sbr.rel (%p638) target = $region60
      $region59: #{attention_forward.2} parent=51 // pred_region
        %p641 = scmp.lt.s32.totalorder %s22, 1
        %s642 = scalar_select %p641, %s22, 1
        %s643 = smul.addr %s642, 8
        %s644 = smul.addr %s643, 4
        %s645 = scalar_lea.vmem %s3, %s644
      $region60: #{attention_forward.2} parent=51 // pred_fallthru
        _
      // Predicated region
      $region61: #{attention_forward.2} parent=51 // pred_check
        %p646 = pneg %p155
      $region62: #{attention_forward.2} parent=51 // pred_check_branch
        %648 = sbr.rel (%p646) target = $region64
      $region63: #{attention_forward.2} parent=51 // pred_region
        %p649 = scmp.lt.s32.totalorder %s22, 1
        %s650 = scalar_select %p649, %s22, 1
        %s651 = smul.addr %s650, 8
        %s652 = smul.addr %s651, 4
        %s653 = scalar_lea.vmem %s4, %s652
      $region64: #{attention_forward.2} parent=51 // pred_fallthru
        _
    $region52: #{attention_forward.2} parent=5 // pred_fallthru
      _
  $region6: #{attention_forward.2} parent=0 // loop_footer
    %s15 = sadd.s32 1, %s11
  $region7: #{attention_forward.2} parent=0 // loop_footer_branch
    %10 = sbr.rel target = $region3
  $region8: #{attention_forward.2} parent=0 // loop_exit
    _

// kernel: attention_forward.3
$region0: #{attention_forward.3}
  #allocation0 [shape = 'u32[]', space=smem, size = 0x4, offset = 0x4, fixed_abs, tag = 'smem constant byte address 0x4 - core index']
  #allocation1 [shape = 'u32[72,128]{1,0:T(1,128)}', space=vmem, size = 0x9000, scoped, tag = 'internal scratch']
  %s0 = inlined_call_operand.vmem [shape: bf16[2,256,4], index: 0, kind: input, shape index: {}]
  %s1 = inlined_call_operand.vmem [shape: bf16[2,64,4], index: 1, kind: input, shape index: {}]
  %s2 = inlined_call_operand.vmem [shape: bf16[2,64,16], index: 2, kind: input, shape index: {}]
  %s3 = inlined_call_operand.vmem [shape: bf16[2,256,32], index: 3, kind: input, shape index: {}]
  %s4 = inlined_call_operand.vmem [shape: bf16[16,32], index: 4, kind: input, shape index: {}]
  %s5 = inlined_call_operand.vmem [shape: f32[2,256,32], index: 5, kind: output, shape index: {}]
  %s6 = sld [smem:[#allocation0]]
  $region53: #{attention_forward.3} parent=0
    _
  %s8 = ssub.s32 1, %s6
  %s9 = scalar_select 0, %s8, %s6
  loop: start=0, step=1, limit=10
  $region2: #{attention_forward.3} parent=0 // loop_pre_header
    _
  $region3: #{attention_forward.3} parent=0 // loop_header
    %s11 = sphi 0, %s15
    %p12 = scmp.ge.s32.totalorder %s11, 10
    %s18 = sphi 0, %s30
    %s19 = sphi 0, %s26
    %s20 = sphi 0, %s18
    %s21 = sphi 0, %s19
    %s22 = sphi 0, %s20
    %s23 = sphi 0, %s21
    %s35 = sphi 0, %s37
    %s38 = sphi 0, %s35
    %s39 = sphi 0, %s38
    %s55 = sphi 0, %s39
    %s61 = sphi 0, %s63
    %s64 = sphi 0, %s61
    %s65 = sphi 0, %s64
    %s81 = sphi 0, %s65
    %s87 = sphi 0, %s89
    %s90 = sphi 0, %s87
    %s91 = sphi 0, %s90
    %s107 = sphi 0, %s91
    %s115 = sphi 0, %s117
    %s118 = sphi 0, %s115
    %s119 = sphi 0, %s118
    %s135 = sphi 0, %s119
    %s139 = sphi 0, %s139
    %s141 = sphi 0, %s139
    %s142 = sphi 0, %s141
    %s156 = sphi 0, %s142
    %s164 = sphi 0, %s166
    %s167 = sphi 0, %s164
    %s168 = sphi 0, %s167
    %s184 = sphi 0, %s168
  $region4: #{attention_forward.3} parent=0 // loop_header_branch
    %14 = sbr.rel (%p12) target = $region8
  $region5: #{attention_forward.3} parent=0 // loop_body
    %s16 = ssub.s32 %s11, 1
    %s17 = ssub.s32 %s11, 2
    %s24 = sadd.s32 1, %s19
    %p25 = scmp.ge.s32.totalorder %s24, 4
    %s26 = scalar_select %p25, 0, %s24
    %s27 = sadd.s32 1, %s18
    %s28 = scalar_select %p25, %s27, %s18
    %p29 = scmp.ge.s32.totalorder %s28, 2
    %s30 = scalar_select %p29, 0, %s28
    %s31 = ssub.s32 %s18, %s30
    %s32 = ssub.s32 %s19, %s26
    %s33 = sor.u32 %s31, %s32
    %p34 = scmp.eq.s32.totalorder %s33, 0
    %s36 = sadd.s32 %s35, 1
    %s37 = scalar_select %p34, %s35, %s36
    %p40 = pneg %p34
    %p41 = scmp.eq.s32.totalorder %s11, 7
    %p42 = por %p40, %p41
    %p43 = scmp.ne.s32.totalorder %s35, %s38
    %p44 = scmp.eq.s32.totalorder %s11, 0
    %p45 = por %p43, %p44
    %p46 = scmp.ne.s32.totalorder %s35, %s38
    %p47 = scmp.eq.s32.totalorder %s16, 7
    %p48 = por %p46, %p47
    %p49 = scmp.ne.s32.totalorder %s38, %s39
    %p50 = scmp.eq.s32.totalorder %s16, 0
    %p51 = por %p49, %p50
    %p52 = scmp.ne.s32.totalorder %s38, %s39
    %p53 = scmp.eq.s32.totalorder %s17, 7
    %p54 = por %p52, %p53
    %p56 = scmp.ne.s32.totalorder %s39, %s55
    %p57 = scmp.eq.s32.totalorder %s17, 0
    %p58 = por %p56, %p57
    %s59 = ssub.s32 %s18, %s30
    %p60 = scmp.eq.s32.totalorder %s59, 0
    %s62 = sadd.s32 %s61, 1
    %s63 = scalar_select %p60, %s61, %s62
    %p66 = pneg %p60
    %p67 = scmp.eq.s32.totalorder %s11, 7
    %p68 = por %p66, %p67
    %p69 = scmp.ne.s32.totalorder %s61, %s64
    %p70 = scmp.eq.s32.totalorder %s11, 0
    %p71 = por %p69, %p70
    %p72 = scmp.ne.s32.totalorder %s61, %s64
    %p73 = scmp.eq.s32.totalorder %s16, 7
    %p74 = por %p72, %p73
    %p75 = scmp.ne.s32.totalorder %s64, %s65
    %p76 = scmp.eq.s32.totalorder %s16, 0
    %p77 = por %p75, %p76
    %p78 = scmp.ne.s32.totalorder %s64, %s65
    %p79 = scmp.eq.s32.totalorder %s17, 7
    %p80 = por %p78, %p79
    %p82 = scmp.ne.s32.totalorder %s65, %s81
    %p83 = scmp.eq.s32.totalorder %s17, 0
    %p84 = por %p82, %p83
    %s85 = ssub.s32 %s18, %s30
    %p86 = scmp.eq.s32.totalorder %s85, 0
    %s88 = sadd.s32 %s87, 1
    %s89 = scalar_select %p86, %s87, %s88
    %p92 = pneg %p86
    %p93 = scmp.eq.s32.totalorder %s11, 7
    %p94 = por %p92, %p93
    %p95 = scmp.ne.s32.totalorder %s87, %s90
    %p96 = scmp.eq.s32.totalorder %s11, 0
    %p97 = por %p95, %p96
    %p98 = scmp.ne.s32.totalorder %s87, %s90
    %p99 = scmp.eq.s32.totalorder %s16, 7
    %p100 = por %p98, %p99
    %p101 = scmp.ne.s32.totalorder %s90, %s91
    %p102 = scmp.eq.s32.totalorder %s16, 0
    %p103 = por %p101, %p102
    %p104 = scmp.ne.s32.totalorder %s90, %s91
    %p105 = scmp.eq.s32.totalorder %s17, 7
    %p106 = por %p104, %p105
    %p108 = scmp.ne.s32.totalorder %s91, %s107
    %p109 = scmp.eq.s32.totalorder %s17, 0
    %p110 = por %p108, %p109
    %s111 = ssub.s32 %s18, %s30
    %s112 = ssub.s32 %s19, %s26
    %s113 = sor.u32 %s111, %s112
    %p114 = scmp.eq.s32.totalorder %s113, 0
    %s116 = sadd.s32 %s115, 1
    %s117 = scalar_select %p114, %s115, %s116
    %p120 = pneg %p114
    %p121 = scmp.eq.s32.totalorder %s11, 7
    %p122 = por %p120, %p121
    %p123 = scmp.ne.s32.totalorder %s115, %s118
    %p124 = scmp.eq.s32.totalorder %s11, 0
    %p125 = por %p123, %p124
    %p126 = scmp.ne.s32.totalorder %s115, %s118
    %p127 = scmp.eq.s32.totalorder %s16, 7
    %p128 = por %p126, %p127
    %p129 = scmp.ne.s32.totalorder %s118, %s119
    %p130 = scmp.eq.s32.totalorder %s16, 0
    %p131 = por %p129, %p130
    %p132 = scmp.ne.s32.totalorder %s118, %s119
    %p133 = scmp.eq.s32.totalorder %s17, 7
    %p134 = por %p132, %p133
    %p136 = scmp.ne.s32.totalorder %s119, %s135
    %p137 = scmp.eq.s32.totalorder %s17, 0
    %p138 = por %p136, %p137
    %s140 = sadd.s32 %s139, 1
    %p143 = scmp.eq.s32.totalorder %s11, 7
    %p144 = scmp.ne.s32.totalorder %s139, %s141
    %p145 = scmp.eq.s32.totalorder %s11, 0
    %p146 = por %p144, %p145
    %p147 = scmp.ne.s32.totalorder %s139, %s141
    %p148 = scmp.eq.s32.totalorder %s16, 7
    %p149 = por %p147, %p148
    %p150 = scmp.ne.s32.totalorder %s141, %s142
    %p151 = scmp.eq.s32.totalorder %s16, 0
    %p152 = por %p150, %p151
    %p153 = scmp.ne.s32.totalorder %s141, %s142
    %p154 = scmp.eq.s32.totalorder %s17, 7
    %p155 = por %p153, %p154
    %p157 = scmp.ne.s32.totalorder %s142, %s156
    %p158 = scmp.eq.s32.totalorder %s17, 0
    %p159 = por %p157, %p158
    %s160 = ssub.s32 %s18, %s30
    %s161 = ssub.s32 %s19, %s26
    %s162 = sor.u32 %s160, %s161
    %p163 = scmp.eq.s32.totalorder %s162, 0
    %s165 = sadd.s32 %s164, 1
    %s166 = scalar_select %p163, %s164, %s165
    %p169 = pneg %p163
    %p170 = scmp.eq.s32.totalorder %s11, 7
    %p171 = por %p169, %p170
    %p172 = scmp.ne.s32.totalorder %s164, %s167
    %p173 = scmp.eq.s32.totalorder %s11, 0
    %p174 = por %p172, %p173
    %p175 = scmp.ne.s32.totalorder %s164, %s167
    %p176 = scmp.eq.s32.totalorder %s16, 7
    %p177 = por %p175, %p176
    %p178 = scmp.ne.s32.totalorder %s167, %s168
    %p179 = scmp.eq.s32.totalorder %s16, 0
    %p180 = por %p178, %p179
    %p181 = scmp.ne.s32.totalorder %s167, %s168
    %p182 = scmp.eq.s32.totalorder %s17, 7
    %p183 = por %p181, %p182
    %p185 = scmp.ne.s32.totalorder %s168, %s184
    %p186 = scmp.eq.s32.totalorder %s17, 0
    %p187 = por %p185, %p186
    %p188 = scmp.le.s32.totalorder 1, %s11
    %p189 = scmp.lt.s32.totalorder %s11, 9
    %p190 = pnand %p188, %p189
    %p191 = pneg %p190
    // Predicated region
    $region9: #{attention_forward.3} parent=5 // pred_check
      _
    $region10: #{attention_forward.3} parent=5 // pred_check_branch
      %193 = sbr.rel (%p190) target = $region12
    $region11: #{attention_forward.3} parent=5 // pred_region
      %s194 = ssub.s32 %s11, 1
      // Predicated region
      $region13: #{attention_forward.3} parent=11 // pred_check
        %p195 = pneg %p152
      $region14: #{attention_forward.3} parent=11 // pred_check_branch
        %197 = sbr.rel (%p195) target = $region16
      $region15: #{attention_forward.3} parent=11 // pred_region
        _
      $region16: #{attention_forward.3} parent=11 // pred_fallthru
        _
    $region12: #{attention_forward.3} parent=5 // pred_fallthru
      _
    %p198 = scmp.lt.s32.totalorder %s11, 8
    // Predicated region
    $region17: #{attention_forward.3} parent=5 // pred_check
      %p199 = pneg %p198
    $region18: #{attention_forward.3} parent=5 // pred_check_branch
      %201 = sbr.rel (%p199) target = $region20
    $region19: #{attention_forward.3} parent=5 // pred_region
      // Predicated region
      $region21: #{attention_forward.3} parent=19 // pred_check
        %p202 = pneg %p45
      $region22: #{attention_forward.3} parent=19 // pred_check_branch
        %204 = sbr.rel (%p202) target = $region24
      $region23: #{attention_forward.3} parent=19 // pred_region
        %s205 = smul.u32 8, %s19
        %p206 = scmp.lt.s32.totalorder %s18, 1
        %s207 = scalar_select %p206, %s18, 1
        %p208 = scmp.lt.s32.totalorder %s205, 31
        %s209 = scalar_select %p208, %s205, 31
        %s210 = smul.addr %s207, 32
        %s211 = sadd.s32 %s209, %s210
        %s212 = smul.addr %s211, 4
        %s213 = scalar_lea.vmem %s0, %s212
        %s214 = smul.u32 8, %s19
      $region24: #{attention_forward.3} parent=19 // pred_fallthru
        _
      // Predicated region
      $region25: #{attention_forward.3} parent=19 // pred_check
        %p215 = pneg %p71
      $region26: #{attention_forward.3} parent=19 // pred_check_branch
        %217 = sbr.rel (%p215) target = $region28
      $region27: #{attention_forward.3} parent=19 // pred_region
        %p218 = scmp.lt.s32.totalorder %s18, 1
        %s219 = scalar_select %p218, %s18, 1
        %s220 = smul.addr %s219, 8
        %s221 = smul.addr %s220, 4
        %s222 = scalar_lea.vmem %s1, %s221
      $region28: #{attention_forward.3} parent=19 // pred_fallthru
        _
      // Predicated region
      $region29: #{attention_forward.3} parent=19 // pred_check
        %p223 = pneg %p97
      $region30: #{attention_forward.3} parent=19 // pred_check_branch
        %225 = sbr.rel (%p223) target = $region32
      $region31: #{attention_forward.3} parent=19 // pred_region
        %p226 = scmp.lt.s32.totalorder %s18, 1
        %s227 = scalar_select %p226, %s18, 1
        %s228 = smul.addr %s227, 8
        %s229 = smul.addr %s228, 4
        %s230 = scalar_lea.vmem %s2, %s229
      $region32: #{attention_forward.3} parent=19 // pred_fallthru
        _
      // Predicated region
      $region33: #{attention_forward.3} parent=19 // pred_check
        %p231 = pneg %p125
      $region34: #{attention_forward.3} parent=19 // pred_check_branch
        %233 = sbr.rel (%p231) target = $region36
      $region35: #{attention_forward.3} parent=19 // pred_region
        %s234 = smul.u32 8, %s19
        %p235 = scmp.lt.s32.totalorder %s18, 1
        %s236 = scalar_select %p235, %s18, 1
        %p237 = scmp.lt.s32.totalorder %s234, 31
        %s238 = scalar_select %p237, %s234, 31
        %s239 = smul.addr %s236, 32
        %s240 = sadd.s32 %s238, %s239
        %s241 = smul.addr %s240, 4
        %s242 = scalar_lea.vmem %s3, %s241
        %s243 = smul.u32 8, %s19
      $region36: #{attention_forward.3} parent=19 // pred_fallthru
        _
    $region20: #{attention_forward.3} parent=5 // pred_fallthru
      _
    %p244 = scmp.le.s32.totalorder 1, %s11
    %p245 = scmp.lt.s32.totalorder %s11, 9
    %p246 = pnand %p244, %p245
    %p247 = pneg %p246
    // Predicated region
    $region37: #{attention_forward.3} parent=5 // pred_check
      _
    $region38: #{attention_forward.3} parent=5 // pred_check_branch
      %249 = sbr.rel (%p246) target = $region40
    $region39: #{attention_forward.3} parent=5 // pred_region
      %s250 = ssub.s32 %s11, 1
      %s251 = smul.u32 8, %s21
      %p252 = scmp.lt.s32.totalorder %s20, 1
      %s253 = scalar_select %p252, %s20, 1
      %p254 = scmp.lt.s32.totalorder %s251, 31
      %s255 = scalar_select %p254, %s251, 31
      %s256 = smul.addr %s253, 32
      %s257 = sadd.s32 %s255, %s256
      %s258 = smul.addr %s257, 4
      %s259 = scalar_lea.vmem %s0, %s258
      %p260 = pneg %p51
      %p261 = pneg %p48
      %p262 = scmp.lt.s32.totalorder %s20, 1
      %s263 = scalar_select %p262, %s20, 1
      %s264 = smul.addr %s263, 8
      %s265 = smul.addr %s264, 4
      %s266 = scalar_lea.vmem %s1, %s265
      %p267 = pneg %p77
      %p268 = pneg %p74
      %p269 = scmp.lt.s32.totalorder %s20, 1
      %s270 = scalar_select %p269, %s20, 1
      %s271 = smul.addr %s270, 8
      %s272 = smul.addr %s271, 4
      %s273 = scalar_lea.vmem %s2, %s272
      %p274 = pneg %p103
      %p275 = pneg %p100
      %s276 = smul.u32 8, %s21
      %p277 = scmp.lt.s32.totalorder %s20, 1
      %s278 = scalar_select %p277, %s20, 1
      %p279 = scmp.lt.s32.totalorder %s276, 31
      %s280 = scalar_select %p279, %s276, 31
      %s281 = smul.addr %s278, 32
      %s282 = sadd.s32 %s280, %s281
      %s283 = smul.addr %s282, 4
      %s284 = scalar_lea.vmem %s3, %s283
      %p285 = pneg %p131
      %p286 = pneg %p128
      %p287 = pneg %p152
      %p288 = pneg %p149
      %p289 = pneg %p180
      %p290 = pneg %p177
      %s291 = smul.u32 8, %s21
      %p292 = scmp.lt.s32.totalorder %s20, 1
      %s293 = scalar_select %p292, %s20, 1
      %p294 = scmp.lt.s32.totalorder %s291, 31
      %s295 = scalar_select %p294, %s291, 31
      %s296 = smul.addr %s293, 32
      %s297 = sadd.s32 %s295, %s296
      %s298 = smul.addr %s297, 8
      %s299 = scalar_lea.vmem %s5, %s298
      %s300 = smul.u32 8, %s21
      %p301 = scmp.lt.s32.totalorder %s20, 1
      %s302 = scalar_select %p301, %s20, 1
      %p303 = scmp.lt.s32.totalorder %s300, 31
      %s304 = scalar_select %p303, %s300, 31
      %s305 = smul.addr %s302, 32
      %s306 = sadd.s32 %s304, %s305
      %s307 = smul.addr %s306, 4
      %s308 = scalar_lea.vmem %s0, %s307
      %s309 = smul.u32 8, %s21
      %p310 = scmp.lt.s32.totalorder %s20, 1
      %s311 = scalar_select %p310, %s20, 1
      %s312 = smul.addr %s311, 8
      %s313 = smul.addr %s312, 4
      %s314 = scalar_lea.vmem %s1, %s313
      %p315 = scmp.lt.s32.totalorder %s20, 1
      %s316 = scalar_select %p315, %s20, 1
      %s317 = smul.addr %s316, 8
      %s318 = smul.addr %s317, 4
      %s319 = scalar_lea.vmem %s2, %s318
      %s320 = smul.u32 8, %s21
      %p321 = scmp.lt.s32.totalorder %s20, 1
      %s322 = scalar_select %p321, %s20, 1
      %p323 = scmp.lt.s32.totalorder %s320, 31
      %s324 = scalar_select %p323, %s320, 31
      %s325 = smul.addr %s322, 32
      %s326 = sadd.s32 %s324, %s325
      %s327 = smul.addr %s326, 4
      %s328 = scalar_lea.vmem %s3, %s327
      %s329 = smul.u32 8, %s21
      %s330 = smul.u32 8, %s21
      %p331 = scmp.lt.s32.totalorder %s20, 1
      %s332 = scalar_select %p331, %s20, 1
      %p333 = scmp.lt.s32.totalorder %s330, 31
      %s334 = scalar_select %p333, %s330, 31
      %s335 = smul.addr %s332, 32
      %s336 = sadd.s32 %s334, %s335
      %s337 = smul.addr %s336, 8
      %s338 = scalar_lea.vmem %s5, %s337
      %s339 = smul.u32 8, %s21
      %v341 = vld [vmem:[%s308] sm:$0xf]
      %v342 = vld [vmem:[%s308 + $0x4] sm:$0xf]
      %v343 = vld [vmem:[%s308 + $0x8] sm:$0xf]
      %v344 = vld [vmem:[%s308 + $0xc] sm:$0xf]
      %v345 = vld [vmem:[%s308 + $0x10] sm:$0xf]
      %v346 = vld [vmem:[%s308 + $0x14] sm:$0xf]
      %v347 = vld [vmem:[%s308 + $0x18] sm:$0xf]
      %v348 = vld [vmem:[%s308 + $0x1c] sm:$0xf]
      %v349 = vld [vmem:[%s314] sm:$0xf]
      %v350 = vld [vmem:[%s314 + $0x4] sm:$0xf]
      %v351 = vld [vmem:[%s314 + $0x8] sm:$0xf]
      %v352 = vld [vmem:[%s314 + $0xc] sm:$0xf]
      %v353 = vld [vmem:[%s314 + $0x10] sm:$0xf]
      %v354 = vld [vmem:[%s314 + $0x14] sm:$0xf]
      %v355 = vld [vmem:[%s314 + $0x18] sm:$0xf]
      %v356 = vld [vmem:[%s314 + $0x1c] sm:$0xf]
      %v365 = vunpack.c.l.b16 %v341
      %v366 = vunpack.c.l.b16 %v342
      %v367 = vunpack.c.l.b16 %v343
      %v368 = vunpack.c.l.b16 %v344
      %v369 = vunpack.c.l.b16 %v345
      %v370 = vunpack.c.l.b16 %v346
      %v371 = vunpack.c.l.b16 %v347
      %v372 = vunpack.c.l.b16 %v348
      %v373 = vpack.c.b16 %v366, %v365
      %v374 = vpack.c.b16 %v368, %v367
      %v375 = vpack.c.b16 %v370, %v369
      %v376 = vpack.c.b16 %v372, %v371
      %v385 = vunpack.c.l.b16 %v349
      %v386 = vunpack.c.l.b16 %v350
      %v387 = vunpack.c.l.b16 %v351
      %v388 = vunpack.c.l.b16 %v352
      %v389 = vunpack.c.l.b16 %v353
      %v390 = vunpack.c.l.b16 %v354
      %v391 = vunpack.c.l.b16 %v355
      %v392 = vunpack.c.l.b16 %v356
      %v393 = vpack.c.b16 %v386, %v385
      %v394 = vpack.c.b16 %v388, %v387
      %v395 = vpack.c.b16 %v390, %v389
      %v396 = vpack.c.b16 %v392, %v391
      %vm397 = vcmask 31744
      %v399 = vsel %vm397, %v373, 0
      %v402 = vsel %vm397, %v374, 0
      %v405 = vsel %vm397, %v375, 0
      %v408 = vsel %vm397, %v376, 0
      %v411 = vsel %vm397, %v393, 0
      %v414 = vsel %vm397, %v394, 0
      %v417 = vsel %vm397, %v395, 0
      %v420 = vsel %vm397, %v396, 0
      %422 = vmatpush.bf16.xpose.msra.mxu0 0
      %423 = vmatpush.bf16.xpose.msra.mxu0 0
      %424 = vmatpush.bf16.xpose.msra.mxu0 0
      %425 = vmatpush.bf16.xpose.msra.mxu0 0
      %426 = vmatpush.bf16.xpose.msra.mxu0 %v420
      %427 = vmatpush.bf16.xpose.msra.mxu0 %v417
      %428 = vmatpush.bf16.xpose.msra.mxu0 %v414
      %429 = vmatpush.bf16.xpose.msra.mxu0 %v411
      %430 = vmatmul.bf16.gmra.mxu0 %v399
      %v431 = vpop.f32.mrf.mxu0
      %v432 = vadd.f32 0.0, %v431
      %v433 = vpop.f32.mrf.mxu0
      %v434 = vadd.f32 0.0, %v433
      %435 = vmatmul.bf16.gmra.mxu0 %v402
      %v436 = vpop.f32.mrf.mxu0
      %v437 = vadd.f32 0.0, %v436
      %v438 = vpop.f32.mrf.mxu0
      %v439 = vadd.f32 0.0, %v438
      %440 = vmatmul.bf16.gmra.mxu0 %v405
      %v441 = vpop.f32.mrf.mxu0
      %v442 = vadd.f32 0.0, %v441
      %v443 = vpop.f32.mrf.mxu0
      %v444 = vadd.f32 0.0, %v443
      %445 = vmatmul.bf16.gmra.mxu0 %v408
      %v446 = vpop.f32.mrf.mxu0
      %v447 = vadd.f32 0.0, %v446
      %v448 = vpop.f32.mrf.mxu0
      %v449 = vadd.f32 0.0, %v448
      %450 = vdwg.mxu0
      %vm451 = vcmask 523264
      %v452 = vsel %vm451, %v432, -inf
      %453 = vmax.xlane.f32.xlu0 %v452
      %v454 = vpop.xlane.xlu0 %453
      %v455 = vsel %vm451, %v434, -inf
      %456 = vmax.xlane.f32.xlu0 %v455
      %v457 = vpop.xlane.xlu0 %456
      %v458 = vsel %vm451, %v437, -inf
      %459 = vmax.xlane.f32.xlu0 %v458
      %v460 = vpop.xlane.xlu0 %459
      %v461 = vsel %vm451, %v439, -inf
      %462 = vmax.xlane.f32.xlu0 %v461
      %v463 = vpop.xlane.xlu0 %462
      %v464 = vsel %vm451, %v442, -inf
      %465 = vmax.xlane.f32.xlu0 %v464
      %v466 = vpop.xlane.xlu0 %465
      %v467 = vsel %vm451, %v444, -inf
      %468 = vmax.xlane.f32.xlu0 %v467
      %v469 = vpop.xlane.xlu0 %468
      %v470 = vsel %vm451, %v447, -inf
      %471 = vmax.xlane.f32.xlu0 %v470
      %v472 = vpop.xlane.xlu0 %471
      %v473 = vsel %vm451, %v449, -inf
      %474 = vmax.xlane.f32.xlu0 %v473
      %v475 = vpop.xlane.xlu0 %474
      %v476 = vsub.f32 %v432, %v454
      %v477 = vsub.f32 %v434, %v457
      %v478 = vsub.f32 %v437, %v460
      %v479 = vsub.f32 %v439, %v463
      %v480 = vsub.f32 %v442, %v466
      %v481 = vsub.f32 %v444, %v469
      %v482 = vsub.f32 %v447, %v472
      %v483 = vsub.f32 %v449, %v475
      %v484 = vpack.c.bf16 %v477, %v476
      %v485 = vpack.c.bf16 %v479, %v478
      %v486 = vpack.c.bf16 %v481, %v480
      %v487 = vpack.c.bf16 %v483, %v482
      %v488 = vunpack.c.l.bf16 %v484
      %v489 = vunpack.c.h.bf16 %v484
      %v490 = vunpack.c.l.bf16 %v485
      %v491 = vunpack.c.h.bf16 %v485
      %v492 = vunpack.c.l.bf16 %v486
      %v493 = vunpack.c.h.bf16 %v486
      %v494 = vunpack.c.l.bf16 %v487
      %v495 = vunpack.c.h.bf16 %v487
      %v496 = vmul.f32 %v488, 1.442695
      %v497 = vpow.pop %v496
      %v498 = vmul.f32 %v489, 1.442695
      %v499 = vpow.pop %v498
      %v500 = vmul.f32 %v490, 1.442695
      %v501 = vpow.pop %v500
      %v502 = vmul.f32 %v491, 1.442695
      %v503 = vpow.pop %v502
      %v504 = vmul.f32 %v492, 1.442695
      %v505 = vpow.pop %v504
      %v506 = vmul.f32 %v493, 1.442695
      %v507 = vpow.pop %v506
      %v508 = vmul.f32 %v494, 1.442695
      %v509 = vpow.pop %v508
      %v510 = vmul.f32 %v495, 1.442695
      %v511 = vpow.pop %v510
      %v512 = vpack.c.bf16 %v499, %v497
      %v513 = vpack.c.bf16 %v503, %v501
      %v514 = vpack.c.bf16 %v507, %v505
      %v515 = vpack.c.bf16 %v511, %v509
      %v516 = vunpack.c.l.bf16 %v512
      %v517 = vunpack.c.h.bf16 %v512
      %v518 = vunpack.c.l.bf16 %v513
      %v519 = vunpack.c.h.bf16 %v513
      %v520 = vunpack.c.l.bf16 %v514
      %v521 = vunpack.c.h.bf16 %v514
      %v522 = vunpack.c.l.bf16 %v515
      %v523 = vunpack.c.h.bf16 %v515
      %v524 = vsel %vm451, %v516, 0.0
      %525 = vadd.xlane.f32.xlu0 %v524
      %v526 = vpop.xlane.xlu0 %525
      %v527 = vsel %vm451, %v517, 0.0
      %528 = vadd.xlane.f32.xlu0 %v527
      %v529 = vpop.xlane.xlu0 %528
      %v530 = vsel %vm451, %v518, 0.0
      %531 = vadd.xlane.f32.xlu0 %v530
      %v532 = vpop.xlane.xlu0 %531
      %v533 = vsel %vm451, %v519, 0.0
      %534 = vadd.xlane.f32.xlu0 %v533
      %v535 = vpop.xlane.xlu0 %534
      %v536 = vsel %vm451, %v520, 0.0
      %537 = vadd.xlane.f32.xlu0 %v536
      %v538 = vpop.xlane.xlu0 %537
      %v539 = vsel %vm451, %v521, 0.0
      %540 = vadd.xlane.f32.xlu0 %v539
      %v541 = vpop.xlane.xlu0 %540
      %v542 = vsel %vm451, %v522, 0.0
      %543 = vadd.xlane.f32.xlu0 %v542
      %v544 = vpop.xlane.xlu0 %543
      %v545 = vsel %vm451, %v523, 0.0
      %546 = vadd.xlane.f32.xlu0 %v545
      %v547 = vpop.xlane.xlu0 %546
      %v548 = vld [vmem:[%s319] sm:$0xf]
      %v549 = vld [vmem:[%s319 + $0x4] sm:$0xf]
      %v550 = vld [vmem:[%s319 + $0x8] sm:$0xf]
      %v551 = vld [vmem:[%s319 + $0xc] sm:$0xf]
      %v552 = vld [vmem:[%s319 + $0x10] sm:$0xf]
      %v553 = vld [vmem:[%s319 + $0x14] sm:$0xf]
      %v554 = vld [vmem:[%s319 + $0x18] sm:$0xf]
      %v555 = vld [vmem:[%s319 + $0x1c] sm:$0xf]
      %v564 = vunpack.c.l.b16 %v548
      %v565 = vunpack.c.l.b16 %v549
      %v566 = vunpack.c.l.b16 %v550
      %v567 = vunpack.c.l.b16 %v551
      %v568 = vunpack.c.l.b16 %v552
      %v569 = vunpack.c.l.b16 %v553
      %v570 = vunpack.c.l.b16 %v554
      %v571 = vunpack.c.l.b16 %v555
      %v572 = vpack.c.b16 %v565, %v564
      %v573 = vpack.c.b16 %v567, %v566
      %v574 = vpack.c.b16 %v569, %v568
      %v575 = vpack.c.b16 %v571, %v570
      %v581 = vsel %vm451, %v512, 0
      %v584 = vsel %vm451, %v513, 0
      %v587 = vsel %vm451, %v514, 0
      %v590 = vsel %vm451, %v515, 0
      %592 = vmatpush.bf16.msra.mxu0 0
      %593 = vmatpush.bf16.msra.mxu0 0
      %594 = vmatpush.bf16.msra.mxu0 0
      %595 = vmatpush.bf16.msra.mxu0 0
      %596 = vmatpush.bf16.msra.mxu0 %v575
      %597 = vmatpush.bf16.msra.mxu0 %v574
      %598 = vmatpush.bf16.msra.mxu0 %v573
      %599 = vmatpush.bf16.msra.mxu0 %v572
      %600 = vmatmul.bf16.gmra.mxu0 %v581
      %v601 = vpop.f32.mrf.mxu0
      %v602 = vadd.f32 0.0, %v601
      %v603 = vpop.f32.mrf.mxu0
      %v604 = vadd.f32 0.0, %v603
      %605 = vmatmul.bf16.gmra.mxu0 %v584
      %v606 = vpop.f32.mrf.mxu0
      %v607 = vadd.f32 0.0, %v606
      %v608 = vpop.f32.mrf.mxu0
      %v609 = vadd.f32 0.0, %v608
      %610 = vmatmul.bf16.gmra.mxu0 %v587
      %v611 = vpop.f32.mrf.mxu0
      %v612 = vadd.f32 0.0, %v611
      %v613 = vpop.f32.mrf.mxu0
      %v614 = vadd.f32 0.0, %v613
      %615 = vmatmul.bf16.gmra.mxu0 %v590
      %v616 = vpop.f32.mrf.mxu0
      %v617 = vadd.f32 0.0, %v616
      %v618 = vpop.f32.mrf.mxu0
      %v619 = vadd.f32 0.0, %v618
      %620 = vdwg.mxu0
      %v621 = vrcp.pop %v526
      %v622 = vrcp.pop %v529
      %v623 = vrcp.pop %v532
      %v624 = vrcp.pop %v535
      %v625 = vrcp.pop %v538
      %v626 = vrcp.pop %v541
      %v627 = vrcp.pop %v544
      %v628 = vrcp.pop %v547
      %v629 = vmul.f32 %v602, %v621
      %v630 = vmul.f32 %v604, %v622
      %v631 = vmul.f32 %v607, %v623
      %v632 = vmul.f32 %v609, %v624
      %v633 = vmul.f32 %v612, %v625
      %v634 = vmul.f32 %v614, %v626
      %v635 = vmul.f32 %v617, %v627
      %v636 = vmul.f32 %v619, %v628
      %v637 = vpack.c.bf16 %v630, %v629
      %v638 = vpack.c.bf16 %v632, %v631
      %v639 = vpack.c.bf16 %v634, %v633
      %v640 = vpack.c.bf16 %v636, %v635
      %v641 = vld [vmem:[%s4] sm:$0xf]
      %v642 = vld [vmem:[%s4 + $0x4] sm:$0xf]
      %v643 = vld [vmem:[%s328] sm:$0xf]
      %v644 = vld [vmem:[%s328 + $0x4] sm:$0xf]
      %v645 = vld [vmem:[%s328 + $0x8] sm:$0xf]
      %v646 = vld [vmem:[%s328 + $0xc] sm:$0xf]
      %v647 = vld [vmem:[%s328 + $0x10] sm:$0xf]
      %v648 = vld [vmem:[%s328 + $0x14] sm:$0xf]
      %v649 = vld [vmem:[%s328 + $0x18] sm:$0xf]
      %v650 = vld [vmem:[%s328 + $0x1c] sm:$0xf]
      %v651 = vunpack.c.l.bf16 %v643
      %v652 = vunpack.c.l.bf16 %v644
      %v653 = vunpack.c.l.bf16 %v645
      %v654 = vunpack.c.l.bf16 %v646
      %v655 = vunpack.c.l.bf16 %v647
      %v656 = vunpack.c.l.bf16 %v648
      %v657 = vunpack.c.l.bf16 %v649
      %v658 = vunpack.c.l.bf16 %v650
      %v661 = vunpack.c.l.b16 %v641
      %v662 = vunpack.c.l.b16 %v642
      %v663 = vpack.c.b16 %v662, %v661
      %vm665 = vcmask 130048
      %v667 = vsel %vm665, %v637, 0
      %v670 = vsel %vm665, %v638, 0
      %v673 = vsel %vm665, %v639, 0
      %v676 = vsel %vm665, %v640, 0
      %678 = vmatpush.bf16.msra.mxu0 0
      %679 = vmatpush.bf16.msra.mxu0 0
      %680 = vmatpush.bf16.msra.mxu0 0
      %681 = vmatpush.bf16.msra.mxu0 0
      %682 = vmatpush.bf16.msra.mxu0 0
      %683 = vmatpush.bf16.msra.mxu0 0
      %684 = vmatpush.bf16.msra.mxu0 0
      %685 = vmatpush.bf16.msra.mxu0 %v663
      %686 = vmatmul.bf16.gmra.mxu0 %v667
      %v687 = vpop.f32.mrf.mxu0
      %v688 = vadd.f32 %v651, %v687
      %v689 = vpop.f32.mrf.mxu0
      %v690 = vadd.f32 %v652, %v689
      %691 = vmatmul.bf16.gmra.mxu0 %v670
      %v692 = vpop.f32.mrf.mxu0
      %v693 = vadd.f32 %v653, %v692
      %v694 = vpop.f32.mrf.mxu0
      %v695 = vadd.f32 %v654, %v694
      %696 = vmatmul.bf16.gmra.mxu0 %v673
      %v697 = vpop.f32.mrf.mxu0
      %v698 = vadd.f32 %v655, %v697
      %v699 = vpop.f32.mrf.mxu0
      %v700 = vadd.f32 %v656, %v699
      %701 = vmatmul.bf16.gmra.mxu0 %v676
      %v702 = vpop.f32.mrf.mxu0
      %v703 = vadd.f32 %v657, %v702
      %v704 = vpop.f32.mrf.mxu0
      %v705 = vadd.f32 %v658, %v704
      %706 = vdwg.mxu0
      %vm707 = vcmask 261120
      %708 = vst.msk [vmem:[%s338] sm:$0xff] %vm707, %v688
      %709 = vst.msk [vmem:[%s338 + $0x8] sm:$0xff] %vm707, %v690
      %710 = vst.msk [vmem:[%s338 + $0x10] sm:$0xff] %vm707, %v693
      %711 = vst.msk [vmem:[%s338 + $0x18] sm:$0xff] %vm707, %v695
      %712 = vst.msk [vmem:[%s338 + $0x20] sm:$0xff] %vm707, %v698
      %713 = vst.msk [vmem:[%s338 + $0x28] sm:$0xff] %vm707, %v700
      %714 = vst.msk [vmem:[%s338 + $0x30] sm:$0xff] %vm707, %v703
      %715 = vst.msk [vmem:[%s338 + $0x38] sm:$0xff] %vm707, %v705
      %s716 = smul.u32 8, %s21
      %p717 = scmp.lt.s32.totalorder %s20, 1
      %s718 = scalar_select %p717, %s20, 1
      %p719 = scmp.lt.s32.totalorder %s716, 31
      %s720 = scalar_select %p719, %s716, 31
      %s721 = smul.addr %s718, 32
      %s722 = sadd.s32 %s720, %s721
      %s723 = smul.addr %s722, 8
      %s724 = scalar_lea.vmem %s5, %s723
      // Predicated region
      $region41: #{attention_forward.3} parent=39 // pred_check
        %p725 = pneg %p177
      $region42: #{attention_forward.3} parent=39 // pred_check_branch
        %727 = sbr.rel (%p725) target = $region44
      $region43: #{attention_forward.3} parent=39 // pred_region
        %s728 = smul.u32 8, %s21
      $region44: #{attention_forward.3} parent=39 // pred_fallthru
        _
    $region40: #{attention_forward.3} parent=5 // pred_fallthru
      _
    %p729 = scmp.le.s32.totalorder 2, %s11
    // Predicated region
    $region45: #{attention_forward.3} parent=5 // pred_check
      %p730 = pneg %p729
    $region46: #{attention_forward.3} parent=5 // pred_check_branch
      %732 = sbr.rel (%p730) target = $region48
    $region47: #{attention_forward.3} parent=5 // pred_region
      %s733 = ssub.s32 %s11, 2
      // Predicated region
      $region49: #{attention_forward.3} parent=47 // pred_check
        %p734 = pneg %p183
      $region50: #{attention_forward.3} parent=47 // pred_check_branch
        %736 = sbr.rel (%p734) target = $region52
      $region51: #{attention_forward.3} parent=47 // pred_region
        %s737 = smul.u32 8, %s23
        %p738 = scmp.lt.s32.totalorder %s22, 1
        %s739 = scalar_select %p738, %s22, 1
        %p740 = scmp.lt.s32.totalorder %s737, 31
        %s741 = scalar_select %p740, %s737, 31
        %s742 = smul.addr %s739, 32
        %s743 = sadd.s32 %s741, %s742
        %s744 = smul.addr %s743, 8
        %s745 = scalar_lea.vmem %s5, %s744
      $region52: #{attention_forward.3} parent=47 // pred_fallthru
        _
    $region48: #{attention_forward.3} parent=5 // pred_fallthru
      _
  $region6: #{attention_forward.3} parent=0 // loop_footer
    %s15 = sadd.s32 1, %s11
  $region7: #{attention_forward.3} parent=0 // loop_footer_branch
    %10 = sbr.rel target = $region3
  $region8: #{attention_forward.3} parent=0 // loop_exit
    _

</llo_original>
